<compile_context>
chip_gen: v7x
topology: tpu7x:2x2x1
jax: 0.10.0
libtpu: 0.0.40
codegen_flags: <defaults>
</compile_context>

<pallas_src>
import jax
import jax.numpy as jnp
from jax.experimental import pallas as pl
from jax.experimental.pallas import tpu as pltpu

H1 = 100
H2 = 300
OUT_DIM = 28 * 28          # 784

H1_P = 128                 # 100 padded to a lane multiple
H2_P = 384                 # 300 padded to a lane multiple
OUT_P = 896                # 784 padded to a lane multiple (7 * 128)


def _decoder_kernel(z_ref, w1_ref, b1_ref, w2_ref, b2_ref, w3_ref, b3_ref,
                    out_ref):
    # Activations f32; weights bf16. Cast the matmul LHS to bf16 so both MXU
    # operands are bf16, accumulate in f32, do all elementwise work in f32.
    x = z_ref[...]                                           # (TB, z_dim) f32
    h = jnp.dot(x.astype(jnp.bfloat16), w1_ref[...],
                preferred_element_type=jnp.float32) + b1_ref[...]
    h = jnp.maximum(h, 0.0)                                  # ReLU (f32)
    h = jnp.dot(h.astype(jnp.bfloat16), w2_ref[...],
                preferred_element_type=jnp.float32) + b2_ref[...]
    h = jnp.maximum(h, 0.0)                                  # ReLU (f32)
    h = jnp.dot(h.astype(jnp.bfloat16), w3_ref[...],
                preferred_element_type=jnp.float32) + b3_ref[...]
    out_ref[...] = jax.nn.sigmoid(h)                         # sigmoid (f32)


@jax.jit
def decoder_forward(z, w1, b1, w2, b2, w3, b3):
    B, z_dim = z.shape

    # Batch tile: big tiles amortize the ~0.35us/step overhead and fill the
    # MXU M dimension; VMEM footprint at tb=512 is ~4 MiB (well under limit).
    if B >= 512:
        tb = 512
    elif B >= 256:
        tb = 256
    else:
        tb = max(8, ((B + 7) // 8) * 8)
    b_pad = ((B + tb - 1) // tb) * tb
    if b_pad != B:
        z = jnp.pad(z, ((0, b_pad - B), (0, 0)))
    grid = (b_pad // tb,)

    flops = 2 * b_pad * (z_dim * H1_P + H1_P * H2_P + H2_P * OUT_P)
    bytes_accessed = (
        z.size * 4                                     # z (f32)
        + (w1.size + w2.size + w3.size) * 2            # weights (bf16)
        + (b1.size + b2.size + b3.size) * 4            # biases (f32)
        + b_pad * OUT_P * 4                            # output (f32)
    )

    out = pl.pallas_call(
        _decoder_kernel,
        out_shape=jax.ShapeDtypeStruct((b_pad, OUT_P), jnp.float32),
        grid=grid,
        in_specs=[
            pl.BlockSpec((tb, z_dim), lambda i: (i, 0)),      # z: tiled on batch
            pl.BlockSpec((z_dim, H1_P), lambda i: (0, 0)),    # weights/biases:
            pl.BlockSpec((1, H1_P), lambda i: (0, 0)),        # VMEM-resident
            pl.BlockSpec((H1_P, H2_P), lambda i: (0, 0)),     # across the grid
            pl.BlockSpec((1, H2_P), lambda i: (0, 0)),
            pl.BlockSpec((H2_P, OUT_P), lambda i: (0, 0)),
            pl.BlockSpec((1, OUT_P), lambda i: (0, 0)),
        ],
        out_specs=pl.BlockSpec((tb, OUT_P), lambda i: (i, 0)),
        compiler_params=pltpu.CompilerParams(
            dimension_semantics=("parallel",)),
        cost_estimate=pl.CostEstimate(
            flops=flops,
            transcendentals=b_pad * OUT_P,   # sigmoid exps
            bytes_accessed=bytes_accessed),
    )(z, w1, b1, w2, b2, w3, b3)

    # Strip batch padding and the lane padding of the last layer.
    return out[:B, :OUT_DIM]


def init_params(key, z_dim):
    """Init mimicking nn.Linear's U(-1/sqrt(fan_in), 1/sqrt(fan_in)).

    Weights are stored pre-transposed as (in_features, out_features) and
    zero-padded to lane-multiple widths, then cast to bfloat16. Biases are
    f32, zero-padded. Zero padding is inert through the ReLU layers and the
    padded output columns are sliced off in the wrapper.
    """
    layers = [
        (z_dim, H1, z_dim, H1_P),
        (H1, H2, H1_P, H2_P),
        (H2, OUT_DIM, H2_P, OUT_P),
    ]
    params = []
    for fan_in, fan_out, in_p, out_p in layers:
        key, kw, kb = jax.random.split(key, 3)
        bound = 1.0 / (float(fan_in) ** 0.5)
        w = jax.random.uniform(kw, (fan_in, fan_out), jnp.float32,
                               minval=-bound, maxval=bound)
        b = jax.random.uniform(kb, (fan_out,), jnp.float32,
                               minval=-bound, maxval=bound)
        w_p = jnp.zeros((in_p, out_p), jnp.float32).at[:fan_in, :fan_out].set(w)
        b_p = jnp.zeros((1, out_p), jnp.float32).at[0, :fan_out].set(b)
        params += [w_p.astype(jnp.bfloat16), b_p]
    return params


def reference_forward(z, w1, b1, w2, b2, w3, b3):
    """Pure-JAX reference with matching bf16-input / f32-accumulate matmuls."""
    h = jnp.dot(z.astype(jnp.bfloat16), w1,
                preferred_element_type=jnp.float32) + b1
    h = jnp.maximum(h, 0.0)
    h = jnp.dot(h.astype(jnp.bfloat16), w2,
                preferred_element_type=jnp.float32) + b2
    h = jnp.maximum(h, 0.0)
    h = jnp.dot(h.astype(jnp.bfloat16), w3,
                preferred_element_type=jnp.float32) + b3
    return jax.nn.sigmoid(h)[:, :OUT_DIM]


if __name__ == "__main__":
    key = jax.random.PRNGKey(0)
    z_dim = 16
    batch = 8

    key, kz = jax.random.split(key)
    z = jax.random.normal(kz, (batch, z_dim), jnp.float32)

    params = init_params(key, z_dim)

    out = jax.block_until_ready(decoder_forward(z, *params))

    # Sanity check against a pure-JAX reference with matching precision.
    ref = jax.block_until_ready(reference_forward(z, *params))
    assert out.shape == (batch, OUT_DIM)
    assert bool(jnp.all(jnp.isfinite(out)))
    assert jnp.allclose(out, ref, atol=1e-3, rtol=1e-3)

    print("KERNEL_OK")
</pallas_src>

<mosaic_0001>
module attributes {stable_mosaic.version = 11 : i64} {
  func.func @_decoder_kernel(%arg0: i32, %arg1: memref<8x16xf32, #tpu.memory_space<vmem>>, %arg2: memref<16x128xbf16, #tpu.memory_space<vmem>>, %arg3: memref<1x128xf32, #tpu.memory_space<vmem>>, %arg4: memref<128x384xbf16, #tpu.memory_space<vmem>>, %arg5: memref<1x384xf32, #tpu.memory_space<vmem>>, %arg6: memref<384x896xbf16, #tpu.memory_space<vmem>>, %arg7: memref<1x896xf32, #tpu.memory_space<vmem>>, %arg8: memref<8x896xf32, #tpu.memory_space<vmem>>) attributes {dimension_semantics = [#tpu.dimension_semantics<parallel>], iteration_bounds = array<i64: 1>, scalar_prefetch = 0 : i64, scratch_operands = 0 : i64, tpu.core_type = #tpu.core_type<tc>, window_params = [{transform_indices = @transform_0, window_bounds = array<i64: 8, 16>}, {pipeline_mode = #tpu.pipeline_mode<synchronous>, transform_indices = @transform_1, window_bounds = array<i64: 16, 128>}, {pipeline_mode = #tpu.pipeline_mode<synchronous>, transform_indices = @transform_2, window_bounds = array<i64: 1, 128>}, {pipeline_mode = #tpu.pipeline_mode<synchronous>, transform_indices = @transform_3, window_bounds = array<i64: 128, 384>}, {pipeline_mode = #tpu.pipeline_mode<synchronous>, transform_indices = @transform_4, window_bounds = array<i64: 1, 384>}, {pipeline_mode = #tpu.pipeline_mode<synchronous>, transform_indices = @transform_5, window_bounds = array<i64: 384, 896>}, {pipeline_mode = #tpu.pipeline_mode<synchronous>, transform_indices = @transform_6, window_bounds = array<i64: 1, 896>}, {transform_indices = @transform_7, window_bounds = array<i64: 8, 896>}]} {
    %c0 = arith.constant 0 : index
    %c0_0 = arith.constant 0 : index
    %0 = vector.load %arg1[%c0, %c0_0] : memref<8x16xf32, #tpu.memory_space<vmem>>, vector<8x16xf32>
    %1 = arith.truncf %0 : vector<8x16xf32> to vector<8x16xbf16>
    %c0_1 = arith.constant 0 : index
    %c0_2 = arith.constant 0 : index
    %2 = vector.load %arg2[%c0_1, %c0_2] : memref<16x128xbf16, #tpu.memory_space<vmem>>, vector<16x128xbf16>
    %cst = arith.constant dense<0.000000e+00> : vector<8x128xf32>
    %3 = tpu.matmul %1, %2, %cst {dimension_numbers = #tpu.dot_dimension_numbers<[1], [0], [0], [1], [0, 0, 1, 1], [], []>} : vector<8x16xbf16>, vector<16x128xbf16>, vector<8x128xf32> -> vector<8x128xf32>
    %c0_3 = arith.constant 0 : index
    %c0_4 = arith.constant 0 : index
    %4 = vector.load %arg3[%c0_3, %c0_4] : memref<1x128xf32, #tpu.memory_space<vmem>>, vector<1x128xf32>
    %5 = vector.broadcast %4 : vector<1x128xf32> to vector<8x128xf32>
    %6 = arith.addf %3, %5 : vector<8x128xf32>
    %cst_5 = arith.constant 0.000000e+00 : f32
    %7 = vector.broadcast %cst_5 : f32 to vector<8x128xf32>
    %8 = arith.maximumf %6, %7 : vector<8x128xf32>
    %9 = arith.truncf %8 : vector<8x128xf32> to vector<8x128xbf16>
    %c0_6 = arith.constant 0 : index
    %c0_7 = arith.constant 0 : index
    %10 = vector.load %arg4[%c0_6, %c0_7] : memref<128x384xbf16, #tpu.memory_space<vmem>>, vector<128x384xbf16>
    %cst_8 = arith.constant dense<0.000000e+00> : vector<8x384xf32>
    %11 = tpu.matmul %9, %10, %cst_8 {dimension_numbers = #tpu.dot_dimension_numbers<[1], [0], [0], [1], [0, 0, 1, 1], [], []>} : vector<8x128xbf16>, vector<128x384xbf16>, vector<8x384xf32> -> vector<8x384xf32>
    %c0_9 = arith.constant 0 : index
    %c0_10 = arith.constant 0 : index
    %12 = vector.load %arg5[%c0_9, %c0_10] : memref<1x384xf32, #tpu.memory_space<vmem>>, vector<1x384xf32>
    %13 = vector.broadcast %12 : vector<1x384xf32> to vector<8x384xf32>
    %14 = arith.addf %11, %13 : vector<8x384xf32>
    %cst_11 = arith.constant 0.000000e+00 : f32
    %15 = vector.broadcast %cst_11 : f32 to vector<8x384xf32>
    %16 = arith.maximumf %14, %15 : vector<8x384xf32>
    %17 = arith.truncf %16 : vector<8x384xf32> to vector<8x384xbf16>
    %c0_12 = arith.constant 0 : index
    %c0_13 = arith.constant 0 : index
    %18 = vector.load %arg6[%c0_12, %c0_13] : memref<384x896xbf16, #tpu.memory_space<vmem>>, vector<384x896xbf16>
    %cst_14 = arith.constant dense<0.000000e+00> : vector<8x896xf32>
    %19 = tpu.matmul %17, %18, %cst_14 {dimension_numbers = #tpu.dot_dimension_numbers<[1], [0], [0], [1], [0, 0, 1, 1], [], []>} : vector<8x384xbf16>, vector<384x896xbf16>, vector<8x896xf32> -> vector<8x896xf32>
    %c0_15 = arith.constant 0 : index
    %c0_16 = arith.constant 0 : index
    %20 = vector.load %arg7[%c0_15, %c0_16] : memref<1x896xf32, #tpu.memory_space<vmem>>, vector<1x896xf32>
    %21 = vector.broadcast %20 : vector<1x896xf32> to vector<8x896xf32>
    %22 = arith.addf %19, %21 : vector<8x896xf32>
    %23 = arith.negf %22 : vector<8x896xf32>
    %24 = math.exp %23 : vector<8x896xf32>
    %cst_17 = arith.constant 1.000000e+00 : f32
    %25 = vector.broadcast %cst_17 : f32 to vector<8x896xf32>
    %26 = arith.addf %25, %24 : vector<8x896xf32>
    %27 = arith.divf %25, %26 : vector<8x896xf32>
    %c0_18 = arith.constant 0 : index
    %c0_19 = arith.constant 0 : index
    %28 = vector.load %arg8[%c0_18, %c0_19] : memref<8x896xf32, #tpu.memory_space<vmem>>, vector<8x896xf32>
    tpu.vector_store %arg8[%c0_18, %c0_19], %27 {strides = array<i32>} : memref<8x896xf32, #tpu.memory_space<vmem>>, vector<8x896xf32>,
    return
  }
  func.func @transform_0(%arg0: i32) -> (i32, i32) {
    %c0_i32 = arith.constant 0 : i32
    %c0_i32_0 = arith.constant 0 : i32
    return %arg0, %c0_i32 : i32, i32
  }
  func.func @transform_1(%arg0: i32) -> (i32, i32) {
    %c0_i32 = arith.constant 0 : i32
    %c0_i32_0 = arith.constant 0 : i32
    %c0_i32_1 = arith.constant 0 : i32
    return %c0_i32, %c0_i32_0 : i32, i32
  }
  func.func @transform_2(%arg0: i32) -> (i32, i32) {
    %c0_i32 = arith.constant 0 : i32
    %c0_i32_0 = arith.constant 0 : i32
    %c0_i32_1 = arith.constant 0 : i32
    return %c0_i32, %c0_i32_0 : i32, i32
  }
  func.func @transform_3(%arg0: i32) -> (i32, i32) {
    %c0_i32 = arith.constant 0 : i32
    %c0_i32_0 = arith.constant 0 : i32
    %c0_i32_1 = arith.constant 0 : i32
    return %c0_i32, %c0_i32_0 : i32, i32
  }
  func.func @transform_4(%arg0: i32) -> (i32, i32) {
    %c0_i32 = arith.constant 0 : i32
    %c0_i32_0 = arith.constant 0 : i32
    %c0_i32_1 = arith.constant 0 : i32
    return %c0_i32, %c0_i32_0 : i32, i32
  }
  func.func @transform_5(%arg0: i32) -> (i32, i32) {
    %c0_i32 = arith.constant 0 : i32
    %c0_i32_0 = arith.constant 0 : i32
    %c0_i32_1 = arith.constant 0 : i32
    return %c0_i32, %c0_i32_0 : i32, i32
  }
  func.func @transform_6(%arg0: i32) -> (i32, i32) {
    %c0_i32 = arith.constant 0 : i32
    %c0_i32_0 = arith.constant 0 : i32
    %c0_i32_1 = arith.constant 0 : i32
    return %c0_i32, %c0_i32_0 : i32, i32
  }
  func.func @transform_7(%arg0: i32) -> (i32, i32) {
    %c0_i32 = arith.constant 0 : i32
    %c0_i32_0 = arith.constant 0 : i32
    return %arg0, %c0_i32 : i32, i32
  }
}

</mosaic_0001>

<llo_original>
// kernel: decoder_forward.1
$region0: #{decoder_forward.1}
  #allocation0 [shape = 'u32[]', space=smem, size = 0x4, offset = 0x4, fixed_abs, tag = 'smem constant byte address 0x4 - core index']
  #allocation1 [shape = 'u32[144,128]{1,0:T(1,128)}', space=vmem, size = 0x12000, scoped, tag = 'internal scratch']
  %s0 = inlined_call_operand.hbm [shape: f32[8,16], index: 0, kind: input, shape index: {}]
  %s1 = inlined_call_operand.hbm [shape: bf16[16,128], index: 1, kind: input, shape index: {}]
  %s2 = inlined_call_operand.vmem [shape: f32[1,128], index: 2, kind: input, shape index: {}]
  %s3 = inlined_call_operand.hbm [shape: bf16[128,384], index: 3, kind: input, shape index: {}]
  %s4 = inlined_call_operand.vmem [shape: f32[1,384], index: 4, kind: input, shape index: {}]
  %s5 = inlined_call_operand.hbm [shape: bf16[384,896], index: 5, kind: input, shape index: {}]
  %s6 = inlined_call_operand.vmem [shape: f32[1,896], index: 6, kind: input, shape index: {}]
  %s7 = inlined_call_operand.hbm [shape: f32[8,896], index: 7, kind: output, shape index: {}]
  %s8 = sld [smem:[#allocation0]]
  $region54: #{decoder_forward.1} parent=0
    _
  %s10 = ssub.s32 1, %s8
  %s11 = scalar_select 0, %s10, %s8
  $region1: #{decoder_forward.1} parent=0
    #allocation2 [shape = 'u8[4096]{0}', space=vmem, size = 0x1000, scoped, tag = 'input window, operand 0, single buffered']
    #allocation3 [shape = 's32[1]{0}', space=sflag, size = 0x4, scoped, tag = 'scoped memory for decoder_forward.1']
    #allocation4 [shape = 's32[1]{0}', space=sflag, size = 0x4, scoped, tag = 'scoped memory for decoder_forward.1']
    #allocation5 [shape = 'u8[4096]{0}', space=vmem, size = 0x1000, scoped, tag = 'input window, operand 1, single buffered']
    #allocation6 [shape = 's32[1]{0}', space=sflag, size = 0x4, scoped, tag = 'scoped memory for decoder_forward.1']
    #allocation7 [shape = 'u8[98304]{0}', space=vmem, size = 0x18000, scoped, tag = 'input window, operand 3, single buffered']
    #allocation8 [shape = 'u8[688128]{0}', space=vmem, size = 0xa8000, scoped, tag = 'input window, operand 5, single buffered']
    #allocation9 [shape = 's32[1]{0}', space=sflag, size = 0x4, scoped, tag = 'scoped memory for decoder_forward.1']
    #allocation10 [shape = 'u8[28672]{0}', space=vmem, size = 0x7000, scoped, tag = 'output window, operand 0, single buffered']
    %12 = vsyncpa [#allocation3], 0
    %13 = vsyncpa [#allocation6], 0
    %14 = vsyncpa [#allocation9], 0
    %15 = vsyncpa [#allocation4], 0
    // Predicated region
    $region2: #{decoder_forward.1} parent=1 // pred_check
      _
    $region3: #{decoder_forward.1} parent=1 // pred_check_branch
      %17 = sbr.rel (0) target = $region5
    $region4: #{decoder_forward.1} parent=1 // pred_region
      %s19 = ssub.s32 128, 128
      %20 = vsyncadd [#allocation3], %s19
      %s22 = sshll.u32 [#allocation2], 4
      %s23 = int_to_ptr.vmem [resolvable:$true] %s22
      %25 = dma.hbm_to_vmem [thread:$0]  %s0, 128, %s23, [#allocation3]
    $region5: #{decoder_forward.1} parent=1 // pred_fallthru
      _
    // Predicated region
    $region6: #{decoder_forward.1} parent=1 // pred_check
      _
    $region7: #{decoder_forward.1} parent=1 // pred_check_branch
      %27 = sbr.rel (0) target = $region9
    $region8: #{decoder_forward.1} parent=1 // pred_region
      %s29 = ssub.s32 128, 128
      %30 = vsyncadd [#allocation6], %s29
      %s31 = sshll.u32 [#allocation5], 4
      %s32 = int_to_ptr.vmem [resolvable:$true] %s31
      %37 = dma.hbm_to_vmem [thread:$0]  %s1, 128, %s32, [#allocation6], 64, 64, 4
    $region9: #{decoder_forward.1} parent=1 // pred_fallthru
      _
    // Predicated region
    $region10: #{decoder_forward.1} parent=1 // pred_check
      _
    $region11: #{decoder_forward.1} parent=1 // pred_check_branch
      %39 = sbr.rel (0) target = $region13
    $region12: #{decoder_forward.1} parent=1 // pred_region
      _
    $region13: #{decoder_forward.1} parent=1 // pred_fallthru
      _
    // Predicated region
    $region14: #{decoder_forward.1} parent=1 // pred_check
      _
    $region15: #{decoder_forward.1} parent=1 // pred_check_branch
      %41 = sbr.rel (0) target = $region17
    $region16: #{decoder_forward.1} parent=1 // pred_region
      %s43 = ssub.s32 3072, 3072
      %44 = vsyncadd [#allocation6], %s43
      %s45 = sshll.u32 [#allocation7], 4
      %s46 = int_to_ptr.vmem [resolvable:$true] %s45
      %51 = dma.hbm_to_vmem [thread:$0]  %s3, 3072, %s46, [#allocation6], 192, 192, 12
    $region17: #{decoder_forward.1} parent=1 // pred_fallthru
      _
    // Predicated region
    $region18: #{decoder_forward.1} parent=1 // pred_check
      _
    $region19: #{decoder_forward.1} parent=1 // pred_check_branch
      %53 = sbr.rel (0) target = $region21
    $region20: #{decoder_forward.1} parent=1 // pred_region
      _
    $region21: #{decoder_forward.1} parent=1 // pred_fallthru
      _
    // Predicated region
    $region22: #{decoder_forward.1} parent=1 // pred_check
      _
    $region23: #{decoder_forward.1} parent=1 // pred_check_branch
      %55 = sbr.rel (0) target = $region25
    $region24: #{decoder_forward.1} parent=1 // pred_region
      %s57 = ssub.s32 21504, 21504
      %58 = vsyncadd [#allocation9], %s57
      %s59 = sshll.u32 [#allocation8], 4
      %s60 = int_to_ptr.vmem [resolvable:$true] %s59
      %65 = dma.hbm_to_vmem [thread:$0]  %s5, 21504, %s60, [#allocation9], 448, 448, 28
    $region25: #{decoder_forward.1} parent=1 // pred_fallthru
      _
    // Predicated region
    $region26: #{decoder_forward.1} parent=1 // pred_check
      _
    $region27: #{decoder_forward.1} parent=1 // pred_check_branch
      %67 = sbr.rel (0) target = $region29
    $region28: #{decoder_forward.1} parent=1 // pred_region
      _
    $region29: #{decoder_forward.1} parent=1 // pred_fallthru
      _
    // Predicated region
    $region30: #{decoder_forward.1} parent=1 // pred_check
      _
    $region31: #{decoder_forward.1} parent=1 // pred_check_branch
      %69 = sbr.rel (0) target = $region33
    $region32: #{decoder_forward.1} parent=1 // pred_region
      %70 = dma.done [#allocation3], 128
    $region33: #{decoder_forward.1} parent=1 // pred_fallthru
      _
    // Predicated region
    $region34: #{decoder_forward.1} parent=1 // pred_check
      _
    $region35: #{decoder_forward.1} parent=1 // pred_check_branch
      %72 = sbr.rel (0) target = $region37
    $region36: #{decoder_forward.1} parent=1 // pred_region
      %73 = dma.done [#allocation6], 128
    $region37: #{decoder_forward.1} parent=1 // pred_fallthru
      _
    // Predicated region
    $region38: #{decoder_forward.1} parent=1 // pred_check
      _
    $region39: #{decoder_forward.1} parent=1 // pred_check_branch
      %75 = sbr.rel (0) target = $region41
    $region40: #{decoder_forward.1} parent=1 // pred_region
      %76 = dma.done [#allocation6], 3072
    $region41: #{decoder_forward.1} parent=1 // pred_fallthru
      _
    // Predicated region
    $region42: #{decoder_forward.1} parent=1 // pred_check
      _
    $region43: #{decoder_forward.1} parent=1 // pred_check_branch
      %78 = sbr.rel (0) target = $region45
    $region44: #{decoder_forward.1} parent=1 // pred_region
      %79 = dma.done [#allocation9], 21504
    $region45: #{decoder_forward.1} parent=1 // pred_fallthru
      _
    %v81 = vld [vmem:[#allocation2] sm:$0xff]
    %v82 = vpack.c.bf16 %v81, %v81
    %v83 = vld [vmem:[#allocation5] sm:$0xf]
    %v84 = vld [vmem:[#allocation5 + $0x4] sm:$0xf]
    %v85 = vld [vmem:[%s2] sm:$0x1]
    %v87 = vlaneseq
    %v88 = vshrl.u32 %v87, 7
    %v89 = vsub.s32 0, %v88
    %v90 = vrot.slane %v85, %v89
    %v94 = vunpack.c.l.b16 %v83
    %v95 = vunpack.c.l.b16 %v84
    %v96 = vpack.c.b16 %v95, %v94
    %vm98 = vcmask 130048
    %v100 = vsel %vm98, %v82, 0
    %102 = vmatprep.subr.bf16.mxu0 0
    %103 = vmatpush1.bf16.msra.mxu0 %v96
    %104 = vmatprep.subr.bf16.mxu0 0
    %105 = vmatpush1.bf16.msra.mxu0 0
    %106 = vmatprep.subr.bf16.mxu0 0
    %107 = vmatpush1.bf16.msra.mxu0 0
    %108 = vmatprep.subr.bf16.mxu0 0
    %109 = vmatpush1.bf16.msra.mxu0 0
    %110 = vmatprep.subr.bf16.mxu0 0
    %111 = vmatpush1.bf16.msra.mxu0 0
    %112 = vmatprep.subr.bf16.mxu0 0
    %113 = vmatpush1.bf16.msra.mxu0 0
    %114 = vmatprep.subr.bf16.mxu0 0
    %115 = vmatpush1.bf16.msra.mxu0 0
    %116 = vmatprep.subr.bf16.mxu0 0
    %117 = vmatpush1.bf16.msra.mxu0 0
    %118 = vmatprep.subr.bf16.mxu0 0
    %119 = vmatpush1.bf16.msra.mxu0 0
    %120 = vmatprep.subr.bf16.mxu0 0
    %121 = vmatpush1.bf16.msra.mxu0 0
    %122 = vmatprep.subr.bf16.mxu0 0
    %123 = vmatpush1.bf16.msra.mxu0 0
    %124 = vmatprep.subr.bf16.mxu0 0
    %125 = vmatpush1.bf16.msra.mxu0 0
    %126 = vmatprep.subr.bf16.mxu0 0
    %127 = vmatpush1.bf16.msra.mxu0 0
    %128 = vmatprep.subr.bf16.mxu0 0
    %129 = vmatpush1.bf16.msra.mxu0 0
    %130 = vmatprep.subr.bf16.mxu0 0
    %131 = vmatpush1.bf16.msra.mxu0 0
    %132 = vmatprep.subr.bf16.mxu0 0
    %133 = vmatpush1.bf16.msra.mxu0 0
    %134 = vmatprep.mubr.bf16.mxu0 0
    %135 = vmatmul.mubr.bf16.gmra.mrb[0].mxu0 %v100
    %v136 = vpop.f32.mrb[0].mxu0
    %v137 = vadd.f32 %v90, %v136
    %v138 = vpop.f32.mrb[0].mxu0
    %v139 = vpop.f32.mrb[0].mxu0
    %v140 = vpop.f32.mrb[0].mxu0
    %141 = vdwg.mxu0
    %v142 = vmax.f32 %v137, 0.0
    %v143 = vpack.c.bf16 %v142, %v142
    %v144 = vld [vmem:[#allocation7] sm:$0xff]
    %v145 = vld [vmem:[#allocation7 + $0x8] sm:$0xf]
    %v146 = vld [vmem:[#allocation7 + $0xc] sm:$0xff]
    %v147 = vld [vmem:[#allocation7 + $0x14] sm:$0xf]
    %v148 = vld [vmem:[#allocation7 + $0x18] sm:$0xff]
    %v149 = vld [vmem:[#allocation7 + $0x20] sm:$0xf]
    %v150 = vld [vmem:[#allocation7 + $0x24] sm:$0xff]
    %v151 = vld [vmem:[#allocation7 + $0x2c] sm:$0xf]
    %v152 = vld [vmem:[#allocation7 + $0x30] sm:$0xff]
    %v153 = vld [vmem:[#allocation7 + $0x38] sm:$0xf]
    %v154 = vld [vmem:[#allocation7 + $0x3c] sm:$0xff]
    %v155 = vld [vmem:[#allocation7 + $0x44] sm:$0xf]
    %v156 = vld [vmem:[#allocation7 + $0x48] sm:$0xff]
    %v157 = vld [vmem:[#allocation7 + $0x50] sm:$0xf]
    %v158 = vld [vmem:[#allocation7 + $0x54] sm:$0xff]
    %v159 = vld [vmem:[#allocation7 + $0x5c] sm:$0xf]
    %v160 = vld [vmem:[#allocation7 + $0x60] sm:$0xff]
    %v161 = vld [vmem:[#allocation7 + $0x68] sm:$0xf]
    %v162 = vld [vmem:[#allocation7 + $0x6c] sm:$0xff]
    %v163 = vld [vmem:[#allocation7 + $0x74] sm:$0xf]
    %v164 = vld [vmem:[#allocation7 + $0x78] sm:$0xff]
    %v165 = vld [vmem:[#allocation7 + $0x80] sm:$0xf]
    %v166 = vld [vmem:[#allocation7 + $0x84] sm:$0xff]
    %v167 = vld [vmem:[#allocation7 + $0x8c] sm:$0xf]
    %v168 = vld [vmem:[#allocation7 + $0x90] sm:$0xff]
    %v169 = vld [vmem:[#allocation7 + $0x98] sm:$0xf]
    %v170 = vld [vmem:[#allocation7 + $0x9c] sm:$0xff]
    %v171 = vld [vmem:[#allocation7 + $0xa4] sm:$0xf]
    %v172 = vld [vmem:[#allocation7 + $0xa8] sm:$0xff]
    %v173 = vld [vmem:[#allocation7 + $0xb0] sm:$0xf]
    %v174 = vld [vmem:[#allocation7 + $0xb4] sm:$0xff]
    %v175 = vld [vmem:[#allocation7 + $0xbc] sm:$0xf]
    %v176 = vld [vmem:[%s4] sm:$0x7]
    %v178 = vlaneseq
    %v179 = vshrl.u32 %v178, 7
    %v180 = vsub.s32 0, %v179
    %v181 = vrot.slane %v176, %v180
    %v182 = vlaneseq
    %v183 = vshrl.u32 %v182, 7
    %v184 = vsub.s32 1, %v183
    %v185 = vrot.slane %v176, %v184
    %v186 = vlaneseq
    %v187 = vshrl.u32 %v186, 7
    %v188 = vsub.s32 2, %v187
    %v189 = vrot.slane %v176, %v188
    %v225 = vunpack.c.l.b16 %v144
    %v226 = vunpack.c.h.b16 %v144
    %v227 = vunpack.c.l.b16 %v145
    %v228 = vunpack.c.l.b16 %v146
    %v229 = vunpack.c.h.b16 %v146
    %v230 = vunpack.c.l.b16 %v147
    %v231 = vunpack.c.l.b16 %v148
    %v232 = vunpack.c.h.b16 %v148
    %v233 = vunpack.c.l.b16 %v149
    %v234 = vunpack.c.l.b16 %v150
    %v235 = vunpack.c.h.b16 %v150
    %v236 = vunpack.c.l.b16 %v151
    %v237 = vunpack.c.l.b16 %v152
    %v238 = vunpack.c.h.b16 %v152
    %v239 = vunpack.c.l.b16 %v153
    %v240 = vunpack.c.l.b16 %v154
    %v241 = vunpack.c.h.b16 %v154
    %v242 = vunpack.c.l.b16 %v155
    %v243 = vunpack.c.l.b16 %v156
    %v244 = vunpack.c.h.b16 %v156
    %v245 = vunpack.c.l.b16 %v157
    %v246 = vunpack.c.l.b16 %v158
    %v247 = vunpack.c.h.b16 %v158
    %v248 = vunpack.c.l.b16 %v159
    %v249 = vunpack.c.l.b16 %v160
    %v250 = vunpack.c.h.b16 %v160
    %v251 = vunpack.c.l.b16 %v161
    %v252 = vunpack.c.l.b16 %v162
    %v253 = vunpack.c.h.b16 %v162
    %v254 = vunpack.c.l.b16 %v163
    %v255 = vunpack.c.l.b16 %v164
    %v256 = vunpack.c.h.b16 %v164
    %v257 = vunpack.c.l.b16 %v165
    %v258 = vunpack.c.l.b16 %v166
    %v259 = vunpack.c.h.b16 %v166
    %v260 = vunpack.c.l.b16 %v167
    %v261 = vunpack.c.l.b16 %v168
    %v262 = vunpack.c.h.b16 %v168
    %v263 = vunpack.c.l.b16 %v169
    %v264 = vunpack.c.l.b16 %v170
    %v265 = vunpack.c.h.b16 %v170
    %v266 = vunpack.c.l.b16 %v171
    %v267 = vunpack.c.l.b16 %v172
    %v268 = vunpack.c.h.b16 %v172
    %v269 = vunpack.c.l.b16 %v173
    %v270 = vunpack.c.l.b16 %v174
    %v271 = vunpack.c.h.b16 %v174
    %v272 = vunpack.c.l.b16 %v175
    %v273 = vpack.c.b16 %v228, %v225
    %v274 = vpack.c.b16 %v229, %v226
    %v275 = vpack.c.b16 %v230, %v227
    %v276 = vpack.c.b16 %v234, %v231
    %v277 = vpack.c.b16 %v235, %v232
    %v278 = vpack.c.b16 %v236, %v233
    %v279 = vpack.c.b16 %v240, %v237
    %v280 = vpack.c.b16 %v241, %v238
    %v281 = vpack.c.b16 %v242, %v239
    %v282 = vpack.c.b16 %v246, %v243
    %v283 = vpack.c.b16 %v247, %v244
    %v284 = vpack.c.b16 %v248, %v245
    %v285 = vpack.c.b16 %v252, %v249
    %v286 = vpack.c.b16 %v253, %v250
    %v287 = vpack.c.b16 %v254, %v251
    %v288 = vpack.c.b16 %v258, %v255
    %v289 = vpack.c.b16 %v259, %v256
    %v290 = vpack.c.b16 %v260, %v257
    %v291 = vpack.c.b16 %v264, %v261
    %v292 = vpack.c.b16 %v265, %v262
    %v293 = vpack.c.b16 %v266, %v263
    %v294 = vpack.c.b16 %v270, %v267
    %v295 = vpack.c.b16 %v271, %v268
    %v296 = vpack.c.b16 %v272, %v269
    %321 = vmatprep.subr.bf16.mxu0 %v274
    %322 = vmatpush1.bf16.msra.mxu0 %v273
    %323 = vmatprep.subr.bf16.mxu0 %v277
    %324 = vmatpush1.bf16.msra.mxu0 %v276
    %325 = vmatprep.subr.bf16.mxu0 %v280
    %326 = vmatpush1.bf16.msra.mxu0 %v279
    %327 = vmatprep.subr.bf16.mxu0 %v283
    %328 = vmatpush1.bf16.msra.mxu0 %v282
    %329 = vmatprep.subr.bf16.mxu0 %v286
    %330 = vmatpush1.bf16.msra.mxu0 %v285
    %331 = vmatprep.subr.bf16.mxu0 %v289
    %332 = vmatpush1.bf16.msra.mxu0 %v288
    %333 = vmatprep.subr.bf16.mxu0 %v292
    %334 = vmatpush1.bf16.msra.mxu0 %v291
    %335 = vmatprep.subr.bf16.mxu0 %v295
    %336 = vmatpush1.bf16.msra.mxu0 %v294
    %337 = vmatprep.subr.bf16.mxu0 0
    %338 = vmatpush1.bf16.msra.mxu0 0
    %339 = vmatprep.subr.bf16.mxu0 0
    %340 = vmatpush1.bf16.msra.mxu0 0
    %341 = vmatprep.subr.bf16.mxu0 0
    %342 = vmatpush1.bf16.msra.mxu0 0
    %343 = vmatprep.subr.bf16.mxu0 0
    %344 = vmatpush1.bf16.msra.mxu0 0
    %345 = vmatprep.subr.bf16.mxu0 0
    %346 = vmatpush1.bf16.msra.mxu0 0
    %347 = vmatprep.subr.bf16.mxu0 0
    %348 = vmatpush1.bf16.msra.mxu0 0
    %349 = vmatprep.subr.bf16.mxu0 0
    %350 = vmatpush1.bf16.msra.mxu0 0
    %351 = vmatprep.subr.bf16.mxu0 0
    %352 = vmatpush1.bf16.msra.mxu0 0
    %353 = vmatprep.mubr.bf16.mxu0 0
    %354 = vmatmul.mubr.bf16.gmra.mrb[0].mxu0 %v143
    %v355 = vpop.f32.mrb[0].mxu0
    %v356 = vadd.f32 %v181, %v355
    %v357 = vpop.f32.mrb[0].mxu0
    %v358 = vadd.f32 %v185, %v357
    %v359 = vpop.f32.mrb[0].mxu0
    %v360 = vpop.f32.mrb[0].mxu0
    %361 = vdwg.mxu0
    %362 = vmatprep.subr.bf16.mxu0 0
    %363 = vmatpush1.bf16.msra.mxu0 %v275
    %364 = vmatprep.subr.bf16.mxu0 0
    %365 = vmatpush1.bf16.msra.mxu0 %v278
    %366 = vmatprep.subr.bf16.mxu0 0
    %367 = vmatpush1.bf16.msra.mxu0 %v281
    %368 = vmatprep.subr.bf16.mxu0 0
    %369 = vmatpush1.bf16.msra.mxu0 %v284
    %370 = vmatprep.subr.bf16.mxu0 0
    %371 = vmatpush1.bf16.msra.mxu0 %v287
    %372 = vmatprep.subr.bf16.mxu0 0
    %373 = vmatpush1.bf16.msra.mxu0 %v290
    %374 = vmatprep.subr.bf16.mxu0 0
    %375 = vmatpush1.bf16.msra.mxu0 %v293
    %376 = vmatprep.subr.bf16.mxu0 0
    %377 = vmatpush1.bf16.msra.mxu0 %v296
    %378 = vmatprep.subr.bf16.mxu0 0
    %379 = vmatpush1.bf16.msra.mxu0 0
    %380 = vmatprep.subr.bf16.mxu0 0
    %381 = vmatpush1.bf16.msra.mxu0 0
    %382 = vmatprep.subr.bf16.mxu0 0
    %383 = vmatpush1.bf16.msra.mxu0 0
    %384 = vmatprep.subr.bf16.mxu0 0
    %385 = vmatpush1.bf16.msra.mxu0 0
    %386 = vmatprep.subr.bf16.mxu0 0
    %387 = vmatpush1.bf16.msra.mxu0 0
    %388 = vmatprep.subr.bf16.mxu0 0
    %389 = vmatpush1.bf16.msra.mxu0 0
    %390 = vmatprep.subr.bf16.mxu0 0
    %391 = vmatpush1.bf16.msra.mxu0 0
    %392 = vmatprep.subr.bf16.mxu0 0
    %393 = vmatpush1.bf16.msra.mxu0 0
    %394 = vmatprep.mubr.bf16.mxu0 0
    %395 = vmatmul.mubr.bf16.gmra.mrb[0].mxu0 %v143
    %v396 = vpop.f32.mrb[0].mxu0
    %v397 = vadd.f32 %v189, %v396
    %v398 = vpop.f32.mrb[0].mxu0
    %v399 = vpop.f32.mrb[0].mxu0
    %v400 = vpop.f32.mrb[0].mxu0
    %401 = vdwg.mxu0
    %v402 = vmax.f32 %v356, 0.0
    %v403 = vmax.f32 %v358, 0.0
    %v404 = vmax.f32 %v397, 0.0
    %v405 = vpack.c.bf16 %v402, %v402
    %v406 = vpack.c.bf16 %v403, %v403
    %v407 = vpack.c.bf16 %v404, %v404
    %v408 = vld [vmem:[#allocation8] sm:$0xff]
    %v409 = vld [vmem:[#allocation8 + $0x8] sm:$0xff]
    %v410 = vld [vmem:[#allocation8 + $0x10] sm:$0xff]
    %v411 = vld [vmem:[#allocation8 + $0x18] sm:$0xf]
    %v412 = vld [vmem:[#allocation8 + $0x1c] sm:$0xff]
    %v413 = vld [vmem:[#allocation8 + $0x24] sm:$0xff]
    %v414 = vld [vmem:[#allocation8 + $0x2c] sm:$0xff]
    %v415 = vld [vmem:[#allocation8 + $0x34] sm:$0xf]
    %v416 = vld [vmem:[#allocation8 + $0x38] sm:$0xff]
    %v417 = vld [vmem:[#allocation8 + $0x40] sm:$0xff]
    %v418 = vld [vmem:[#allocation8 + $0x48] sm:$0xff]
    %v419 = vld [vmem:[#allocation8 + $0x50] sm:$0xf]
    %v420 = vld [vmem:[#allocation8 + $0x54] sm:$0xff]
    %v421 = vld [vmem:[#allocation8 + $0x5c] sm:$0xff]
    %v422 = vld [vmem:[#allocation8 + $0x64] sm:$0xff]
    %v423 = vld [vmem:[#allocation8 + $0x6c] sm:$0xf]
    %v424 = vld [vmem:[#allocation8 + $0x70] sm:$0xff]
    %v425 = vld [vmem:[#allocation8 + $0x78] sm:$0xff]
    %v426 = vld [vmem:[#allocation8 + $0x80] sm:$0xff]
    %v427 = vld [vmem:[#allocation8 + $0x88] sm:$0xf]
    %v428 = vld [vmem:[#allocation8 + $0x8c] sm:$0xff]
    %v429 = vld [vmem:[#allocation8 + $0x94] sm:$0xff]
    %v430 = vld [vmem:[#allocation8 + $0x9c] sm:$0xff]
    %v431 = vld [vmem:[#allocation8 + $0xa4] sm:$0xf]
    %v432 = vld [vmem:[#allocation8 + $0xa8] sm:$0xff]
    %v433 = vld [vmem:[#allocation8 + $0xb0] sm:$0xff]
    %v434 = vld [vmem:[#allocation8 + $0xb8] sm:$0xff]
    %v435 = vld [vmem:[#allocation8 + $0xc0] sm:$0xf]
    %v436 = vld [vmem:[#allocation8 + $0xc4] sm:$0xff]
    %v437 = vld [vmem:[#allocation8 + $0xcc] sm:$0xff]
    %v438 = vld [vmem:[#allocation8 + $0xd4] sm:$0xff]
    %v439 = vld [vmem:[#allocation8 + $0xdc] sm:$0xf]
    %v440 = vld [vmem:[#allocation8 + $0xe0] sm:$0xff]
    %v441 = vld [vmem:[#allocation8 + $0xe8] sm:$0xff]
    %v442 = vld [vmem:[#allocation8 + $0xf0] sm:$0xff]
    %v443 = vld [vmem:[#allocation8 + $0xf8] sm:$0xf]
    %v444 = vld [vmem:[#allocation8 + $0xfc] sm:$0xff]
    %v445 = vld [vmem:[#allocation8 + $0x104] sm:$0xff]
    %v446 = vld [vmem:[#allocation8 + $0x10c] sm:$0xff]
    %v447 = vld [vmem:[#allocation8 + $0x114] sm:$0xf]
    %v448 = vld [vmem:[#allocation8 + $0x118] sm:$0xff]
    %v449 = vld [vmem:[#allocation8 + $0x120] sm:$0xff]
    %v450 = vld [vmem:[#allocation8 + $0x128] sm:$0xff]
    %v451 = vld [vmem:[#allocation8 + $0x130] sm:$0xf]
    %v452 = vld [vmem:[#allocation8 + $0x134] sm:$0xff]
    %v453 = vld [vmem:[#allocation8 + $0x13c] sm:$0xff]
    %v454 = vld [vmem:[#allocation8 + $0x144] sm:$0xff]
    %v455 = vld [vmem:[#allocation8 + $0x14c] sm:$0xf]
    %v456 = vld [vmem:[#allocation8 + $0x150] sm:$0xff]
    %v457 = vld [vmem:[#allocation8 + $0x158] sm:$0xff]
    %v458 = vld [vmem:[#allocation8 + $0x160] sm:$0xff]
    %v459 = vld [vmem:[#allocation8 + $0x168] sm:$0xf]
    %v460 = vld [vmem:[#allocation8 + $0x16c] sm:$0xff]
    %v461 = vld [vmem:[#allocation8 + $0x174] sm:$0xff]
    %v462 = vld [vmem:[#allocation8 + $0x17c] sm:$0xff]
    %v463 = vld [vmem:[#allocation8 + $0x184] sm:$0xf]
    %v464 = vld [vmem:[#allocation8 + $0x188] sm:$0xff]
    %v465 = vld [vmem:[#allocation8 + $0x190] sm:$0xff]
    %v466 = vld [vmem:[#allocation8 + $0x198] sm:$0xff]
    %v467 = vld [vmem:[#allocation8 + $0x1a0] sm:$0xf]
    %v468 = vld [vmem:[#allocation8 + $0x1a4] sm:$0xff]
    %v469 = vld [vmem:[#allocation8 + $0x1ac] sm:$0xff]
    %v470 = vld [vmem:[#allocation8 + $0x1b4] sm:$0xff]
    %v471 = vld [vmem:[#allocation8 + $0x1bc] sm:$0xf]
    %v472 = vld [vmem:[#allocation8 + $0x1c0] sm:$0xff]
    %v473 = vld [vmem:[#allocation8 + $0x1c8] sm:$0xff]
    %v474 = vld [vmem:[#allocation8 + $0x1d0] sm:$0xff]
    %v475 = vld [vmem:[#allocation8 + $0x1d8] sm:$0xf]
    %v476 = vld [vmem:[#allocation8 + $0x1dc] sm:$0xff]
    %v477 = vld [vmem:[#allocation8 + $0x1e4] sm:$0xff]
    %v478 = vld [vmem:[#allocation8 + $0x1ec] sm:$0xff]
    %v479 = vld [vmem:[#allocation8 + $0x1f4] sm:$0xf]
    %v480 = vld [vmem:[#allocation8 + $0x1f8] sm:$0xff]
    %v481 = vld [vmem:[#allocation8 + $0x200] sm:$0xff]
    %v482 = vld [vmem:[#allocation8 + $0x208] sm:$0xff]
    %v483 = vld [vmem:[#allocation8 + $0x210] sm:$0xf]
    %v484 = vld [vmem:[#allocation8 + $0x214] sm:$0xff]
    %v485 = vld [vmem:[#allocation8 + $0x21c] sm:$0xff]
    %v486 = vld [vmem:[#allocation8 + $0x224] sm:$0xff]
    %v487 = vld [vmem:[#allocation8 + $0x22c] sm:$0xf]
    %v488 = vld [vmem:[#allocation8 + $0x230] sm:$0xff]
    %v489 = vld [vmem:[#allocation8 + $0x238] sm:$0xff]
    %v490 = vld [vmem:[#allocation8 + $0x240] sm:$0xff]
    %v491 = vld [vmem:[#allocation8 + $0x248] sm:$0xf]
    %v492 = vld [vmem:[#allocation8 + $0x24c] sm:$0xff]
    %v493 = vld [vmem:[#allocation8 + $0x254] sm:$0xff]
    %v494 = vld [vmem:[#allocation8 + $0x25c] sm:$0xff]
    %v495 = vld [vmem:[#allocation8 + $0x264] sm:$0xf]
    %v496 = vld [vmem:[#allocation8 + $0x268] sm:$0xff]
    %v497 = vld [vmem:[#allocation8 + $0x270] sm:$0xff]
    %v498 = vld [vmem:[#allocation8 + $0x278] sm:$0xff]
    %v499 = vld [vmem:[#allocation8 + $0x280] sm:$0xf]
    %v500 = vld [vmem:[#allocation8 + $0x284] sm:$0xff]
    %v501 = vld [vmem:[#allocation8 + $0x28c] sm:$0xff]
    %v502 = vld [vmem:[#allocation8 + $0x294] sm:$0xff]
    %v503 = vld [vmem:[#allocation8 + $0x29c] sm:$0xf]
    %v504 = vld [vmem:[#allocation8 + $0x2a0] sm:$0xff]
    %v505 = vld [vmem:[#allocation8 + $0x2a8] sm:$0xff]
    %v506 = vld [vmem:[#allocation8 + $0x2b0] sm:$0xff]
    %v507 = vld [vmem:[#allocation8 + $0x2b8] sm:$0xf]
    %v508 = vld [vmem:[#allocation8 + $0x2bc] sm:$0xff]
    %v509 = vld [vmem:[#allocation8 + $0x2c4] sm:$0xff]
    %v510 = vld [vmem:[#allocation8 + $0x2cc] sm:$0xff]
    %v511 = vld [vmem:[#allocation8 + $0x2d4] sm:$0xf]
    %v512 = vld [vmem:[#allocation8 + $0x2d8] sm:$0xff]
    %v513 = vld [vmem:[#allocation8 + $0x2e0] sm:$0xff]
    %v514 = vld [vmem:[#allocation8 + $0x2e8] sm:$0xff]
    %v515 = vld [vmem:[#allocation8 + $0x2f0] sm:$0xf]
    %v516 = vld [vmem:[#allocation8 + $0x2f4] sm:$0xff]
    %v517 = vld [vmem:[#allocation8 + $0x2fc] sm:$0xff]
    %v518 = vld [vmem:[#allocation8 + $0x304] sm:$0xff]
    %v519 = vld [vmem:[#allocation8 + $0x30c] sm:$0xf]
    %v520 = vld [vmem:[#allocation8 + $0x310] sm:$0xff]
    %v521 = vld [vmem:[#allocation8 + $0x318] sm:$0xff]
    %v522 = vld [vmem:[#allocation8 + $0x320] sm:$0xff]
    %v523 = vld [vmem:[#allocation8 + $0x328] sm:$0xf]
    %v524 = vld [vmem:[#allocation8 + $0x32c] sm:$0xff]
    %v525 = vld [vmem:[#allocation8 + $0x334] sm:$0xff]
    %v526 = vld [vmem:[#allocation8 + $0x33c] sm:$0xff]
    %v527 = vld [vmem:[#allocation8 + $0x344] sm:$0xf]
    %v528 = vld [vmem:[#allocation8 + $0x348] sm:$0xff]
    %v529 = vld [vmem:[#allocation8 + $0x350] sm:$0xff]
    %v530 = vld [vmem:[#allocation8 + $0x358] sm:$0xff]
    %v531 = vld [vmem:[#allocation8 + $0x360] sm:$0xf]
    %v532 = vld [vmem:[#allocation8 + $0x364] sm:$0xff]
    %v533 = vld [vmem:[#allocation8 + $0x36c] sm:$0xff]
    %v534 = vld [vmem:[#allocation8 + $0x374] sm:$0xff]
    %v535 = vld [vmem:[#allocation8 + $0x37c] sm:$0xf]
    %v536 = vld [vmem:[#allocation8 + $0x380] sm:$0xff]
    %v537 = vld [vmem:[#allocation8 + $0x388] sm:$0xff]
    %v538 = vld [vmem:[#allocation8 + $0x390] sm:$0xff]
    %v539 = vld [vmem:[#allocation8 + $0x398] sm:$0xf]
    %v540 = vld [vmem:[#allocation8 + $0x39c] sm:$0xff]
    %v541 = vld [vmem:[#allocation8 + $0x3a4] sm:$0xff]
    %v542 = vld [vmem:[#allocation8 + $0x3ac] sm:$0xff]
    %v543 = vld [vmem:[#allocation8 + $0x3b4] sm:$0xf]
    %v544 = vld [vmem:[#allocation8 + $0x3b8] sm:$0xff]
    %v545 = vld [vmem:[#allocation8 + $0x3c0] sm:$0xff]
    %v546 = vld [vmem:[#allocation8 + $0x3c8] sm:$0xff]
    %v547 = vld [vmem:[#allocation8 + $0x3d0] sm:$0xf]
    %v548 = vld [vmem:[#allocation8 + $0x3d4] sm:$0xff]
    %v549 = vld [vmem:[#allocation8 + $0x3dc] sm:$0xff]
    %v550 = vld [vmem:[#allocation8 + $0x3e4] sm:$0xff]
    %v551 = vld [vmem:[#allocation8 + $0x3ec] sm:$0xf]
    %v552 = vld [vmem:[#allocation8 + $0x3f0] sm:$0xff]
    %v553 = vld [vmem:[#allocation8 + $0x3f8] sm:$0xff]
    %v554 = vld [vmem:[#allocation8 + $0x400] sm:$0xff]
    %v555 = vld [vmem:[#allocation8 + $0x408] sm:$0xf]
    %v556 = vld [vmem:[#allocation8 + $0x40c] sm:$0xff]
    %v557 = vld [vmem:[#allocation8 + $0x414] sm:$0xff]
    %v558 = vld [vmem:[#allocation8 + $0x41c] sm:$0xff]
    %v559 = vld [vmem:[#allocation8 + $0x424] sm:$0xf]
    %v560 = vld [vmem:[#allocation8 + $0x428] sm:$0xff]
    %v561 = vld [vmem:[#allocation8 + $0x430] sm:$0xff]
    %v562 = vld [vmem:[#allocation8 + $0x438] sm:$0xff]
    %v563 = vld [vmem:[#allocation8 + $0x440] sm:$0xf]
    %v564 = vld [vmem:[#allocation8 + $0x444] sm:$0xff]
    %v565 = vld [vmem:[#allocation8 + $0x44c] sm:$0xff]
    %v566 = vld [vmem:[#allocation8 + $0x454] sm:$0xff]
    %v567 = vld [vmem:[#allocation8 + $0x45c] sm:$0xf]
    %v568 = vld [vmem:[#allocation8 + $0x460] sm:$0xff]
    %v569 = vld [vmem:[#allocation8 + $0x468] sm:$0xff]
    %v570 = vld [vmem:[#allocation8 + $0x470] sm:$0xff]
    %v571 = vld [vmem:[#allocation8 + $0x478] sm:$0xf]
    %v572 = vld [vmem:[#allocation8 + $0x47c] sm:$0xff]
    %v573 = vld [vmem:[#allocation8 + $0x484] sm:$0xff]
    %v574 = vld [vmem:[#allocation8 + $0x48c] sm:$0xff]
    %v575 = vld [vmem:[#allocation8 + $0x494] sm:$0xf]
    %v576 = vld [vmem:[#allocation8 + $0x498] sm:$0xff]
    %v577 = vld [vmem:[#allocation8 + $0x4a0] sm:$0xff]
    %v578 = vld [vmem:[#allocation8 + $0x4a8] sm:$0xff]
    %v579 = vld [vmem:[#allocation8 + $0x4b0] sm:$0xf]
    %v580 = vld [vmem:[#allocation8 + $0x4b4] sm:$0xff]
    %v581 = vld [vmem:[#allocation8 + $0x4bc] sm:$0xff]
    %v582 = vld [vmem:[#allocation8 + $0x4c4] sm:$0xff]
    %v583 = vld [vmem:[#allocation8 + $0x4cc] sm:$0xf]
    %v584 = vld [vmem:[#allocation8 + $0x4d0] sm:$0xff]
    %v585 = vld [vmem:[#allocation8 + $0x4d8] sm:$0xff]
    %v586 = vld [vmem:[#allocation8 + $0x4e0] sm:$0xff]
    %v587 = vld [vmem:[#allocation8 + $0x4e8] sm:$0xf]
    %v588 = vld [vmem:[#allocation8 + $0x4ec] sm:$0xff]
    %v589 = vld [vmem:[#allocation8 + $0x4f4] sm:$0xff]
    %v590 = vld [vmem:[#allocation8 + $0x4fc] sm:$0xff]
    %v591 = vld [vmem:[#allocation8 + $0x504] sm:$0xf]
    %v592 = vld [vmem:[#allocation8 + $0x508] sm:$0xff]
    %v593 = vld [vmem:[#allocation8 + $0x510] sm:$0xff]
    %v594 = vld [vmem:[#allocation8 + $0x518] sm:$0xff]
    %v595 = vld [vmem:[#allocation8 + $0x520] sm:$0xf]
    %v596 = vld [vmem:[#allocation8 + $0x524] sm:$0xff]
    %v597 = vld [vmem:[#allocation8 + $0x52c] sm:$0xff]
    %v598 = vld [vmem:[#allocation8 + $0x534] sm:$0xff]
    %v599 = vld [vmem:[#allocation8 + $0x53c] sm:$0xf]
    %v600 = vld [vmem:[%s6] sm:$0xff]
    %v602 = vlaneseq
    %v603 = vshrl.u32 %v602, 7
    %v604 = vsub.s32 0, %v603
    %v605 = vrot.slane %v600, %v604
    %v606 = vlaneseq
    %v607 = vshrl.u32 %v606, 7
    %v608 = vsub.s32 1, %v607
    %v609 = vrot.slane %v600, %v608
    %v610 = vlaneseq
    %v611 = vshrl.u32 %v610, 7
    %v612 = vsub.s32 2, %v611
    %v613 = vrot.slane %v600, %v612
    %v614 = vlaneseq
    %v615 = vshrl.u32 %v614, 7
    %v616 = vsub.s32 3, %v615
    %v617 = vrot.slane %v600, %v616
    %v618 = vlaneseq
    %v619 = vshrl.u32 %v618, 7
    %v620 = vsub.s32 4, %v619
    %v621 = vrot.slane %v600, %v620
    %v622 = vlaneseq
    %v623 = vshrl.u32 %v622, 7
    %v624 = vsub.s32 5, %v623
    %v625 = vrot.slane %v600, %v624
    %v626 = vlaneseq
    %v627 = vshrl.u32 %v626, 7
    %v628 = vsub.s32 6, %v627
    %v629 = vrot.slane %v600, %v628
    %v829 = vunpack.c.l.b16 %v408
    %v830 = vunpack.c.h.b16 %v408
    %v831 = vunpack.c.l.b16 %v409
    %v832 = vunpack.c.h.b16 %v409
    %v833 = vunpack.c.l.b16 %v410
    %v834 = vunpack.c.h.b16 %v410
    %v835 = vunpack.c.l.b16 %v411
    %v836 = vunpack.c.l.b16 %v412
    %v837 = vunpack.c.h.b16 %v412
    %v838 = vunpack.c.l.b16 %v413
    %v839 = vunpack.c.h.b16 %v413
    %v840 = vunpack.c.l.b16 %v414
    %v841 = vunpack.c.h.b16 %v414
    %v842 = vunpack.c.l.b16 %v415
    %v843 = vunpack.c.l.b16 %v416
    %v844 = vunpack.c.h.b16 %v416
    %v845 = vunpack.c.l.b16 %v417
    %v846 = vunpack.c.h.b16 %v417
    %v847 = vunpack.c.l.b16 %v418
    %v848 = vunpack.c.h.b16 %v418
    %v849 = vunpack.c.l.b16 %v419
    %v850 = vunpack.c.l.b16 %v420
    %v851 = vunpack.c.h.b16 %v420
    %v852 = vunpack.c.l.b16 %v421
    %v853 = vunpack.c.h.b16 %v421
    %v854 = vunpack.c.l.b16 %v422
    %v855 = vunpack.c.h.b16 %v422
    %v856 = vunpack.c.l.b16 %v423
    %v857 = vunpack.c.l.b16 %v424
    %v858 = vunpack.c.h.b16 %v424
    %v859 = vunpack.c.l.b16 %v425
    %v860 = vunpack.c.h.b16 %v425
    %v861 = vunpack.c.l.b16 %v426
    %v862 = vunpack.c.h.b16 %v426
    %v863 = vunpack.c.l.b16 %v427
    %v864 = vunpack.c.l.b16 %v428
    %v865 = vunpack.c.h.b16 %v428
    %v866 = vunpack.c.l.b16 %v429
    %v867 = vunpack.c.h.b16 %v429
    %v868 = vunpack.c.l.b16 %v430
    %v869 = vunpack.c.h.b16 %v430
    %v870 = vunpack.c.l.b16 %v431
    %v871 = vunpack.c.l.b16 %v432
    %v872 = vunpack.c.h.b16 %v432
    %v873 = vunpack.c.l.b16 %v433
    %v874 = vunpack.c.h.b16 %v433
    %v875 = vunpack.c.l.b16 %v434
    %v876 = vunpack.c.h.b16 %v434
    %v877 = vunpack.c.l.b16 %v435
    %v878 = vunpack.c.l.b16 %v436
    %v879 = vunpack.c.h.b16 %v436
    %v880 = vunpack.c.l.b16 %v437
    %v881 = vunpack.c.h.b16 %v437
    %v882 = vunpack.c.l.b16 %v438
    %v883 = vunpack.c.h.b16 %v438
    %v884 = vunpack.c.l.b16 %v439
    %v885 = vunpack.c.l.b16 %v440
    %v886 = vunpack.c.h.b16 %v440
    %v887 = vunpack.c.l.b16 %v441
    %v888 = vunpack.c.h.b16 %v441
    %v889 = vunpack.c.l.b16 %v442
    %v890 = vunpack.c.h.b16 %v442
    %v891 = vunpack.c.l.b16 %v443
    %v892 = vunpack.c.l.b16 %v444
    %v893 = vunpack.c.h.b16 %v444
    %v894 = vunpack.c.l.b16 %v445
    %v895 = vunpack.c.h.b16 %v445
    %v896 = vunpack.c.l.b16 %v446
    %v897 = vunpack.c.h.b16 %v446
    %v898 = vunpack.c.l.b16 %v447
    %v899 = vunpack.c.l.b16 %v448
    %v900 = vunpack.c.h.b16 %v448
    %v901 = vunpack.c.l.b16 %v449
    %v902 = vunpack.c.h.b16 %v449
    %v903 = vunpack.c.l.b16 %v450
    %v904 = vunpack.c.h.b16 %v450
    %v905 = vunpack.c.l.b16 %v451
    %v906 = vunpack.c.l.b16 %v452
    %v907 = vunpack.c.h.b16 %v452
    %v908 = vunpack.c.l.b16 %v453
    %v909 = vunpack.c.h.b16 %v453
    %v910 = vunpack.c.l.b16 %v454
    %v911 = vunpack.c.h.b16 %v454
    %v912 = vunpack.c.l.b16 %v455
    %v913 = vunpack.c.l.b16 %v456
    %v914 = vunpack.c.h.b16 %v456
    %v915 = vunpack.c.l.b16 %v457
    %v916 = vunpack.c.h.b16 %v457
    %v917 = vunpack.c.l.b16 %v458
    %v918 = vunpack.c.h.b16 %v458
    %v919 = vunpack.c.l.b16 %v459
    %v920 = vunpack.c.l.b16 %v460
    %v921 = vunpack.c.h.b16 %v460
    %v922 = vunpack.c.l.b16 %v461
    %v923 = vunpack.c.h.b16 %v461
    %v924 = vunpack.c.l.b16 %v462
    %v925 = vunpack.c.h.b16 %v462
    %v926 = vunpack.c.l.b16 %v463
    %v927 = vunpack.c.l.b16 %v464
    %v928 = vunpack.c.h.b16 %v464
    %v929 = vunpack.c.l.b16 %v465
    %v930 = vunpack.c.h.b16 %v465
    %v931 = vunpack.c.l.b16 %v466
    %v932 = vunpack.c.h.b16 %v466
    %v933 = vunpack.c.l.b16 %v467
    %v934 = vunpack.c.l.b16 %v468
    %v935 = vunpack.c.h.b16 %v468
    %v936 = vunpack.c.l.b16 %v469
    %v937 = vunpack.c.h.b16 %v469
    %v938 = vunpack.c.l.b16 %v470
    %v939 = vunpack.c.h.b16 %v470
    %v940 = vunpack.c.l.b16 %v471
    %v941 = vunpack.c.l.b16 %v472
    %v942 = vunpack.c.h.b16 %v472
    %v943 = vunpack.c.l.b16 %v473
    %v944 = vunpack.c.h.b16 %v473
    %v945 = vunpack.c.l.b16 %v474
    %v946 = vunpack.c.h.b16 %v474
    %v947 = vunpack.c.l.b16 %v475
    %v948 = vunpack.c.l.b16 %v476
    %v949 = vunpack.c.h.b16 %v476
    %v950 = vunpack.c.l.b16 %v477
    %v951 = vunpack.c.h.b16 %v477
    %v952 = vunpack.c.l.b16 %v478
    %v953 = vunpack.c.h.b16 %v478
    %v954 = vunpack.c.l.b16 %v479
    %v955 = vunpack.c.l.b16 %v480
    %v956 = vunpack.c.h.b16 %v480
    %v957 = vunpack.c.l.b16 %v481
    %v958 = vunpack.c.h.b16 %v481
    %v959 = vunpack.c.l.b16 %v482
    %v960 = vunpack.c.h.b16 %v482
    %v961 = vunpack.c.l.b16 %v483
    %v962 = vunpack.c.l.b16 %v484
    %v963 = vunpack.c.h.b16 %v484
    %v964 = vunpack.c.l.b16 %v485
    %v965 = vunpack.c.h.b16 %v485
    %v966 = vunpack.c.l.b16 %v486
    %v967 = vunpack.c.h.b16 %v486
    %v968 = vunpack.c.l.b16 %v487
    %v969 = vunpack.c.l.b16 %v488
    %v970 = vunpack.c.h.b16 %v488
    %v971 = vunpack.c.l.b16 %v489
    %v972 = vunpack.c.h.b16 %v489
    %v973 = vunpack.c.l.b16 %v490
    %v974 = vunpack.c.h.b16 %v490
    %v975 = vunpack.c.l.b16 %v491
    %v976 = vunpack.c.l.b16 %v492
    %v977 = vunpack.c.h.b16 %v492
    %v978 = vunpack.c.l.b16 %v493
    %v979 = vunpack.c.h.b16 %v493
    %v980 = vunpack.c.l.b16 %v494
    %v981 = vunpack.c.h.b16 %v494
    %v982 = vunpack.c.l.b16 %v495
    %v983 = vunpack.c.l.b16 %v496
    %v984 = vunpack.c.h.b16 %v496
    %v985 = vunpack.c.l.b16 %v497
    %v986 = vunpack.c.h.b16 %v497
    %v987 = vunpack.c.l.b16 %v498
    %v988 = vunpack.c.h.b16 %v498
    %v989 = vunpack.c.l.b16 %v499
    %v990 = vunpack.c.l.b16 %v500
    %v991 = vunpack.c.h.b16 %v500
    %v992 = vunpack.c.l.b16 %v501
    %v993 = vunpack.c.h.b16 %v501
    %v994 = vunpack.c.l.b16 %v502
    %v995 = vunpack.c.h.b16 %v502
    %v996 = vunpack.c.l.b16 %v503
    %v997 = vunpack.c.l.b16 %v504
    %v998 = vunpack.c.h.b16 %v504
    %v999 = vunpack.c.l.b16 %v505
    %v1000 = vunpack.c.h.b16 %v505
    %v1001 = vunpack.c.l.b16 %v506
    %v1002 = vunpack.c.h.b16 %v506
    %v1003 = vunpack.c.l.b16 %v507
    %v1004 = vunpack.c.l.b16 %v508
    %v1005 = vunpack.c.h.b16 %v508
    %v1006 = vunpack.c.l.b16 %v509
    %v1007 = vunpack.c.h.b16 %v509
    %v1008 = vunpack.c.l.b16 %v510
    %v1009 = vunpack.c.h.b16 %v510
    %v1010 = vunpack.c.l.b16 %v511
    %v1011 = vunpack.c.l.b16 %v512
    %v1012 = vunpack.c.h.b16 %v512
    %v1013 = vunpack.c.l.b16 %v513
    %v1014 = vunpack.c.h.b16 %v513
    %v1015 = vunpack.c.l.b16 %v514
    %v1016 = vunpack.c.h.b16 %v514
    %v1017 = vunpack.c.l.b16 %v515
    %v1018 = vunpack.c.l.b16 %v516
    %v1019 = vunpack.c.h.b16 %v516
    %v1020 = vunpack.c.l.b16 %v517
    %v1021 = vunpack.c.h.b16 %v517
    %v1022 = vunpack.c.l.b16 %v518
    %v1023 = vunpack.c.h.b16 %v518
    %v1024 = vunpack.c.l.b16 %v519
    %v1025 = vunpack.c.l.b16 %v520
    %v1026 = vunpack.c.h.b16 %v520
    %v1027 = vunpack.c.l.b16 %v521
    %v1028 = vunpack.c.h.b16 %v521
    %v1029 = vunpack.c.l.b16 %v522
    %v1030 = vunpack.c.h.b16 %v522
    %v1031 = vunpack.c.l.b16 %v523
    %v1032 = vunpack.c.l.b16 %v524
    %v1033 = vunpack.c.h.b16 %v524
    %v1034 = vunpack.c.l.b16 %v525
    %v1035 = vunpack.c.h.b16 %v525
    %v1036 = vunpack.c.l.b16 %v526
    %v1037 = vunpack.c.h.b16 %v526
    %v1038 = vunpack.c.l.b16 %v527
    %v1039 = vunpack.c.l.b16 %v528
    %v1040 = vunpack.c.h.b16 %v528
    %v1041 = vunpack.c.l.b16 %v529
    %v1042 = vunpack.c.h.b16 %v529
    %v1043 = vunpack.c.l.b16 %v530
    %v1044 = vunpack.c.h.b16 %v530
    %v1045 = vunpack.c.l.b16 %v531
    %v1046 = vunpack.c.l.b16 %v532
    %v1047 = vunpack.c.h.b16 %v532
    %v1048 = vunpack.c.l.b16 %v533
    %v1049 = vunpack.c.h.b16 %v533
    %v1050 = vunpack.c.l.b16 %v534
    %v1051 = vunpack.c.h.b16 %v534
    %v1052 = vunpack.c.l.b16 %v535
    %v1053 = vunpack.c.l.b16 %v536
    %v1054 = vunpack.c.h.b16 %v536
    %v1055 = vunpack.c.l.b16 %v537
    %v1056 = vunpack.c.h.b16 %v537
    %v1057 = vunpack.c.l.b16 %v538
    %v1058 = vunpack.c.h.b16 %v538
    %v1059 = vunpack.c.l.b16 %v539
    %v1060 = vunpack.c.l.b16 %v540
    %v1061 = vunpack.c.h.b16 %v540
    %v1062 = vunpack.c.l.b16 %v541
    %v1063 = vunpack.c.h.b16 %v541
    %v1064 = vunpack.c.l.b16 %v542
    %v1065 = vunpack.c.h.b16 %v542
    %v1066 = vunpack.c.l.b16 %v543
    %v1067 = vunpack.c.l.b16 %v544
    %v1068 = vunpack.c.h.b16 %v544
    %v1069 = vunpack.c.l.b16 %v545
    %v1070 = vunpack.c.h.b16 %v545
    %v1071 = vunpack.c.l.b16 %v546
    %v1072 = vunpack.c.h.b16 %v546
    %v1073 = vunpack.c.l.b16 %v547
    %v1074 = vunpack.c.l.b16 %v548
    %v1075 = vunpack.c.h.b16 %v548
    %v1076 = vunpack.c.l.b16 %v549
    %v1077 = vunpack.c.h.b16 %v549
    %v1078 = vunpack.c.l.b16 %v550
    %v1079 = vunpack.c.h.b16 %v550
    %v1080 = vunpack.c.l.b16 %v551
    %v1081 = vunpack.c.l.b16 %v552
    %v1082 = vunpack.c.h.b16 %v552
    %v1083 = vunpack.c.l.b16 %v553
    %v1084 = vunpack.c.h.b16 %v553
    %v1085 = vunpack.c.l.b16 %v554
    %v1086 = vunpack.c.h.b16 %v554
    %v1087 = vunpack.c.l.b16 %v555
    %v1088 = vunpack.c.l.b16 %v556
    %v1089 = vunpack.c.h.b16 %v556
    %v1090 = vunpack.c.l.b16 %v557
    %v1091 = vunpack.c.h.b16 %v557
    %v1092 = vunpack.c.l.b16 %v558
    %v1093 = vunpack.c.h.b16 %v558
    %v1094 = vunpack.c.l.b16 %v559
    %v1095 = vunpack.c.l.b16 %v560
    %v1096 = vunpack.c.h.b16 %v560
    %v1097 = vunpack.c.l.b16 %v561
    %v1098 = vunpack.c.h.b16 %v561
    %v1099 = vunpack.c.l.b16 %v562
    %v1100 = vunpack.c.h.b16 %v562
    %v1101 = vunpack.c.l.b16 %v563
    %v1102 = vunpack.c.l.b16 %v564
    %v1103 = vunpack.c.h.b16 %v564
    %v1104 = vunpack.c.l.b16 %v565
    %v1105 = vunpack.c.h.b16 %v565
    %v1106 = vunpack.c.l.b16 %v566
    %v1107 = vunpack.c.h.b16 %v566
    %v1108 = vunpack.c.l.b16 %v567
    %v1109 = vunpack.c.l.b16 %v568
    %v1110 = vunpack.c.h.b16 %v568
    %v1111 = vunpack.c.l.b16 %v569
    %v1112 = vunpack.c.h.b16 %v569
    %v1113 = vunpack.c.l.b16 %v570
    %v1114 = vunpack.c.h.b16 %v570
    %v1115 = vunpack.c.l.b16 %v571
    %v1116 = vunpack.c.l.b16 %v572
    %v1117 = vunpack.c.h.b16 %v572
    %v1118 = vunpack.c.l.b16 %v573
    %v1119 = vunpack.c.h.b16 %v573
    %v1120 = vunpack.c.l.b16 %v574
    %v1121 = vunpack.c.h.b16 %v574
    %v1122 = vunpack.c.l.b16 %v575
    %v1123 = vunpack.c.l.b16 %v576
    %v1124 = vunpack.c.h.b16 %v576
    %v1125 = vunpack.c.l.b16 %v577
    %v1126 = vunpack.c.h.b16 %v577
    %v1127 = vunpack.c.l.b16 %v578
    %v1128 = vunpack.c.h.b16 %v578
    %v1129 = vunpack.c.l.b16 %v579
    %v1130 = vunpack.c.l.b16 %v580
    %v1131 = vunpack.c.h.b16 %v580
    %v1132 = vunpack.c.l.b16 %v581
    %v1133 = vunpack.c.h.b16 %v581
    %v1134 = vunpack.c.l.b16 %v582
    %v1135 = vunpack.c.h.b16 %v582
    %v1136 = vunpack.c.l.b16 %v583
    %v1137 = vunpack.c.l.b16 %v584
    %v1138 = vunpack.c.h.b16 %v584
    %v1139 = vunpack.c.l.b16 %v585
    %v1140 = vunpack.c.h.b16 %v585
    %v1141 = vunpack.c.l.b16 %v586
    %v1142 = vunpack.c.h.b16 %v586
    %v1143 = vunpack.c.l.b16 %v587
    %v1144 = vunpack.c.l.b16 %v588
    %v1145 = vunpack.c.h.b16 %v588
    %v1146 = vunpack.c.l.b16 %v589
    %v1147 = vunpack.c.h.b16 %v589
    %v1148 = vunpack.c.l.b16 %v590
    %v1149 = vunpack.c.h.b16 %v590
    %v1150 = vunpack.c.l.b16 %v591
    %v1151 = vunpack.c.l.b16 %v592
    %v1152 = vunpack.c.h.b16 %v592
    %v1153 = vunpack.c.l.b16 %v593
    %v1154 = vunpack.c.h.b16 %v593
    %v1155 = vunpack.c.l.b16 %v594
    %v1156 = vunpack.c.h.b16 %v594
    %v1157 = vunpack.c.l.b16 %v595
    %v1158 = vunpack.c.l.b16 %v596
    %v1159 = vunpack.c.h.b16 %v596
    %v1160 = vunpack.c.l.b16 %v597
    %v1161 = vunpack.c.h.b16 %v597
    %v1162 = vunpack.c.l.b16 %v598
    %v1163 = vunpack.c.h.b16 %v598
    %v1164 = vunpack.c.l.b16 %v599
    %v1165 = vpack.c.b16 %v836, %v829
    %v1166 = vpack.c.b16 %v837, %v830
    %v1167 = vpack.c.b16 %v838, %v831
    %v1168 = vpack.c.b16 %v839, %v832
    %v1169 = vpack.c.b16 %v840, %v833
    %v1170 = vpack.c.b16 %v841, %v834
    %v1171 = vpack.c.b16 %v842, %v835
    %v1172 = vpack.c.b16 %v850, %v843
    %v1173 = vpack.c.b16 %v851, %v844
    %v1174 = vpack.c.b16 %v852, %v845
    %v1175 = vpack.c.b16 %v853, %v846
    %v1176 = vpack.c.b16 %v854, %v847
    %v1177 = vpack.c.b16 %v855, %v848
    %v1178 = vpack.c.b16 %v856, %v849
    %v1179 = vpack.c.b16 %v864, %v857
    %v1180 = vpack.c.b16 %v865, %v858
    %v1181 = vpack.c.b16 %v866, %v859
    %v1182 = vpack.c.b16 %v867, %v860
    %v1183 = vpack.c.b16 %v868, %v861
    %v1184 = vpack.c.b16 %v869, %v862
    %v1185 = vpack.c.b16 %v870, %v863
    %v1186 = vpack.c.b16 %v878, %v871
    %v1187 = vpack.c.b16 %v879, %v872
    %v1188 = vpack.c.b16 %v880, %v873
    %v1189 = vpack.c.b16 %v881, %v874
    %v1190 = vpack.c.b16 %v882, %v875
    %v1191 = vpack.c.b16 %v883, %v876
    %v1192 = vpack.c.b16 %v884, %v877
    %v1193 = vpack.c.b16 %v892, %v885
    %v1194 = vpack.c.b16 %v893, %v886
    %v1195 = vpack.c.b16 %v894, %v887
    %v1196 = vpack.c.b16 %v895, %v888
    %v1197 = vpack.c.b16 %v896, %v889
    %v1198 = vpack.c.b16 %v897, %v890
    %v1199 = vpack.c.b16 %v898, %v891
    %v1200 = vpack.c.b16 %v906, %v899
    %v1201 = vpack.c.b16 %v907, %v900
    %v1202 = vpack.c.b16 %v908, %v901
    %v1203 = vpack.c.b16 %v909, %v902
    %v1204 = vpack.c.b16 %v910, %v903
    %v1205 = vpack.c.b16 %v911, %v904
    %v1206 = vpack.c.b16 %v912, %v905
    %v1207 = vpack.c.b16 %v920, %v913
    %v1208 = vpack.c.b16 %v921, %v914
    %v1209 = vpack.c.b16 %v922, %v915
    %v1210 = vpack.c.b16 %v923, %v916
    %v1211 = vpack.c.b16 %v924, %v917
    %v1212 = vpack.c.b16 %v925, %v918
    %v1213 = vpack.c.b16 %v926, %v919
    %v1214 = vpack.c.b16 %v934, %v927
    %v1215 = vpack.c.b16 %v935, %v928
    %v1216 = vpack.c.b16 %v936, %v929
    %v1217 = vpack.c.b16 %v937, %v930
    %v1218 = vpack.c.b16 %v938, %v931
    %v1219 = vpack.c.b16 %v939, %v932
    %v1220 = vpack.c.b16 %v940, %v933
    %v1221 = vpack.c.b16 %v948, %v941
    %v1222 = vpack.c.b16 %v949, %v942
    %v1223 = vpack.c.b16 %v950, %v943
    %v1224 = vpack.c.b16 %v951, %v944
    %v1225 = vpack.c.b16 %v952, %v945
    %v1226 = vpack.c.b16 %v953, %v946
    %v1227 = vpack.c.b16 %v954, %v947
    %v1228 = vpack.c.b16 %v962, %v955
    %v1229 = vpack.c.b16 %v963, %v956
    %v1230 = vpack.c.b16 %v964, %v957
    %v1231 = vpack.c.b16 %v965, %v958
    %v1232 = vpack.c.b16 %v966, %v959
    %v1233 = vpack.c.b16 %v967, %v960
    %v1234 = vpack.c.b16 %v968, %v961
    %v1235 = vpack.c.b16 %v976, %v969
    %v1236 = vpack.c.b16 %v977, %v970
    %v1237 = vpack.c.b16 %v978, %v971
    %v1238 = vpack.c.b16 %v979, %v972
    %v1239 = vpack.c.b16 %v980, %v973
    %v1240 = vpack.c.b16 %v981, %v974
    %v1241 = vpack.c.b16 %v982, %v975
    %v1242 = vpack.c.b16 %v990, %v983
    %v1243 = vpack.c.b16 %v991, %v984
    %v1244 = vpack.c.b16 %v992, %v985
    %v1245 = vpack.c.b16 %v993, %v986
    %v1246 = vpack.c.b16 %v994, %v987
    %v1247 = vpack.c.b16 %v995, %v988
    %v1248 = vpack.c.b16 %v996, %v989
    %v1249 = vpack.c.b16 %v1004, %v997
    %v1250 = vpack.c.b16 %v1005, %v998
    %v1251 = vpack.c.b16 %v1006, %v999
    %v1252 = vpack.c.b16 %v1007, %v1000
    %v1253 = vpack.c.b16 %v1008, %v1001
    %v1254 = vpack.c.b16 %v1009, %v1002
    %v1255 = vpack.c.b16 %v1010, %v1003
    %v1256 = vpack.c.b16 %v1018, %v1011
    %v1257 = vpack.c.b16 %v1019, %v1012
    %v1258 = vpack.c.b16 %v1020, %v1013
    %v1259 = vpack.c.b16 %v1021, %v1014
    %v1260 = vpack.c.b16 %v1022, %v1015
    %v1261 = vpack.c.b16 %v1023, %v1016
    %v1262 = vpack.c.b16 %v1024, %v1017
    %v1263 = vpack.c.b16 %v1032, %v1025
    %v1264 = vpack.c.b16 %v1033, %v1026
    %v1265 = vpack.c.b16 %v1034, %v1027
    %v1266 = vpack.c.b16 %v1035, %v1028
    %v1267 = vpack.c.b16 %v1036, %v1029
    %v1268 = vpack.c.b16 %v1037, %v1030
    %v1269 = vpack.c.b16 %v1038, %v1031
    %v1270 = vpack.c.b16 %v1046, %v1039
    %v1271 = vpack.c.b16 %v1047, %v1040
    %v1272 = vpack.c.b16 %v1048, %v1041
    %v1273 = vpack.c.b16 %v1049, %v1042
    %v1274 = vpack.c.b16 %v1050, %v1043
    %v1275 = vpack.c.b16 %v1051, %v1044
    %v1276 = vpack.c.b16 %v1052, %v1045
    %v1277 = vpack.c.b16 %v1060, %v1053
    %v1278 = vpack.c.b16 %v1061, %v1054
    %v1279 = vpack.c.b16 %v1062, %v1055
    %v1280 = vpack.c.b16 %v1063, %v1056
    %v1281 = vpack.c.b16 %v1064, %v1057
    %v1282 = vpack.c.b16 %v1065, %v1058
    %v1283 = vpack.c.b16 %v1066, %v1059
    %v1284 = vpack.c.b16 %v1074, %v1067
    %v1285 = vpack.c.b16 %v1075, %v1068
    %v1286 = vpack.c.b16 %v1076, %v1069
    %v1287 = vpack.c.b16 %v1077, %v1070
    %v1288 = vpack.c.b16 %v1078, %v1071
    %v1289 = vpack.c.b16 %v1079, %v1072
    %v1290 = vpack.c.b16 %v1080, %v1073
    %v1291 = vpack.c.b16 %v1088, %v1081
    %v1292 = vpack.c.b16 %v1089, %v1082
    %v1293 = vpack.c.b16 %v1090, %v1083
    %v1294 = vpack.c.b16 %v1091, %v1084
    %v1295 = vpack.c.b16 %v1092, %v1085
    %v1296 = vpack.c.b16 %v1093, %v1086
    %v1297 = vpack.c.b16 %v1094, %v1087
    %v1298 = vpack.c.b16 %v1102, %v1095
    %v1299 = vpack.c.b16 %v1103, %v1096
    %v1300 = vpack.c.b16 %v1104, %v1097
    %v1301 = vpack.c.b16 %v1105, %v1098
    %v1302 = vpack.c.b16 %v1106, %v1099
    %v1303 = vpack.c.b16 %v1107, %v1100
    %v1304 = vpack.c.b16 %v1108, %v1101
    %v1305 = vpack.c.b16 %v1116, %v1109
    %v1306 = vpack.c.b16 %v1117, %v1110
    %v1307 = vpack.c.b16 %v1118, %v1111
    %v1308 = vpack.c.b16 %v1119, %v1112
    %v1309 = vpack.c.b16 %v1120, %v1113
    %v1310 = vpack.c.b16 %v1121, %v1114
    %v1311 = vpack.c.b16 %v1122, %v1115
    %v1312 = vpack.c.b16 %v1130, %v1123
    %v1313 = vpack.c.b16 %v1131, %v1124
    %v1314 = vpack.c.b16 %v1132, %v1125
    %v1315 = vpack.c.b16 %v1133, %v1126
    %v1316 = vpack.c.b16 %v1134, %v1127
    %v1317 = vpack.c.b16 %v1135, %v1128
    %v1318 = vpack.c.b16 %v1136, %v1129
    %v1319 = vpack.c.b16 %v1144, %v1137
    %v1320 = vpack.c.b16 %v1145, %v1138
    %v1321 = vpack.c.b16 %v1146, %v1139
    %v1322 = vpack.c.b16 %v1147, %v1140
    %v1323 = vpack.c.b16 %v1148, %v1141
    %v1324 = vpack.c.b16 %v1149, %v1142
    %v1325 = vpack.c.b16 %v1150, %v1143
    %v1326 = vpack.c.b16 %v1158, %v1151
    %v1327 = vpack.c.b16 %v1159, %v1152
    %v1328 = vpack.c.b16 %v1160, %v1153
    %v1329 = vpack.c.b16 %v1161, %v1154
    %v1330 = vpack.c.b16 %v1162, %v1155
    %v1331 = vpack.c.b16 %v1163, %v1156
    %v1332 = vpack.c.b16 %v1164, %v1157
    %1501 = vmatprep.subr.bf16.mxu0 %v1166
    %1502 = vmatpush1.bf16.msra.mxu0 %v1165
    %1503 = vmatprep.subr.bf16.mxu0 %v1173
    %1504 = vmatpush1.bf16.msra.mxu0 %v1172
    %1505 = vmatprep.subr.bf16.mxu0 %v1180
    %1506 = vmatpush1.bf16.msra.mxu0 %v1179
    %1507 = vmatprep.subr.bf16.mxu0 %v1187
    %1508 = vmatpush1.bf16.msra.mxu0 %v1186
    %1509 = vmatprep.subr.bf16.mxu0 %v1194
    %1510 = vmatpush1.bf16.msra.mxu0 %v1193
    %1511 = vmatprep.subr.bf16.mxu0 %v1201
    %1512 = vmatpush1.bf16.msra.mxu0 %v1200
    %1513 = vmatprep.subr.bf16.mxu0 %v1208
    %1514 = vmatpush1.bf16.msra.mxu0 %v1207
    %1515 = vmatprep.subr.bf16.mxu0 %v1215
    %1516 = vmatpush1.bf16.msra.mxu0 %v1214
    %1517 = vmatprep.subr.bf16.mxu0 %v1222
    %1518 = vmatpush1.bf16.msra.mxu0 %v1221
    %1519 = vmatprep.subr.bf16.mxu0 %v1229
    %1520 = vmatpush1.bf16.msra.mxu0 %v1228
    %1521 = vmatprep.subr.bf16.mxu0 %v1236
    %1522 = vmatpush1.bf16.msra.mxu0 %v1235
    %1523 = vmatprep.subr.bf16.mxu0 %v1243
    %1524 = vmatpush1.bf16.msra.mxu0 %v1242
    %1525 = vmatprep.subr.bf16.mxu0 %v1250
    %1526 = vmatpush1.bf16.msra.mxu0 %v1249
    %1527 = vmatprep.subr.bf16.mxu0 %v1257
    %1528 = vmatpush1.bf16.msra.mxu0 %v1256
    %1529 = vmatprep.subr.bf16.mxu0 %v1264
    %1530 = vmatpush1.bf16.msra.mxu0 %v1263
    %1531 = vmatprep.subr.bf16.mxu0 %v1271
    %1532 = vmatpush1.bf16.msra.mxu0 %v1270
    %1533 = vmatprep.mubr.bf16.mxu0 %v406
    %1534 = vmatmul.mubr.bf16.gmra.mrb[0].mxu0 %v405
    %v1535 = vpop.f32.mrb[0].mxu0
    %v1536 = vadd.f32 %v605, %v1535
    %v1537 = vpop.f32.mrb[0].mxu0
    %v1538 = vadd.f32 %v609, %v1537
    %v1539 = vpop.f32.mrb[0].mxu0
    %v1540 = vpop.f32.mrb[0].mxu0
    %1541 = vdwg.mxu0
    %1542 = vmatprep.subr.bf16.mxu0 %v1278
    %1543 = vmatpush1.bf16.msra.mxu0 %v1277
    %1544 = vmatprep.subr.bf16.mxu0 %v1285
    %1545 = vmatpush1.bf16.msra.mxu0 %v1284
    %1546 = vmatprep.subr.bf16.mxu0 %v1292
    %1547 = vmatpush1.bf16.msra.mxu0 %v1291
    %1548 = vmatprep.subr.bf16.mxu0 %v1299
    %1549 = vmatpush1.bf16.msra.mxu0 %v1298
    %1550 = vmatprep.subr.bf16.mxu0 %v1306
    %1551 = vmatpush1.bf16.msra.mxu0 %v1305
    %1552 = vmatprep.subr.bf16.mxu0 %v1313
    %1553 = vmatpush1.bf16.msra.mxu0 %v1312
    %1554 = vmatprep.subr.bf16.mxu0 %v1320
    %1555 = vmatpush1.bf16.msra.mxu0 %v1319
    %1556 = vmatprep.subr.bf16.mxu0 %v1327
    %1557 = vmatpush1.bf16.msra.mxu0 %v1326
    %1558 = vmatprep.subr.bf16.mxu0 0
    %1559 = vmatpush1.bf16.msra.mxu0 0
    %1560 = vmatprep.subr.bf16.mxu0 0
    %1561 = vmatpush1.bf16.msra.mxu0 0
    %1562 = vmatprep.subr.bf16.mxu0 0
    %1563 = vmatpush1.bf16.msra.mxu0 0
    %1564 = vmatprep.subr.bf16.mxu0 0
    %1565 = vmatpush1.bf16.msra.mxu0 0
    %1566 = vmatprep.subr.bf16.mxu0 0
    %1567 = vmatpush1.bf16.msra.mxu0 0
    %1568 = vmatprep.subr.bf16.mxu0 0
    %1569 = vmatpush1.bf16.msra.mxu0 0
    %1570 = vmatprep.subr.bf16.mxu0 0
    %1571 = vmatpush1.bf16.msra.mxu0 0
    %1572 = vmatprep.subr.bf16.mxu0 0
    %1573 = vmatpush1.bf16.msra.mxu0 0
    %1574 = vmatprep.mubr.bf16.mxu0 0
    %1575 = vmatmul.mubr.bf16.gmra.mrb[0].mxu0 %v407
    %v1576 = vpop.f32.mrb[0].mxu0
    %v1577 = vadd.f32 %v1536, %v1576
    %v1578 = vpop.f32.mrb[0].mxu0
    %v1579 = vadd.f32 %v1538, %v1578
    %v1580 = vpop.f32.mrb[0].mxu0
    %v1581 = vpop.f32.mrb[0].mxu0
    %1582 = vdwg.mxu0
    %1583 = vmatprep.subr.bf16.mxu0 %v1168
    %1584 = vmatpush1.bf16.msra.mxu0 %v1167
    %1585 = vmatprep.subr.bf16.mxu0 %v1175
    %1586 = vmatpush1.bf16.msra.mxu0 %v1174
    %1587 = vmatprep.subr.bf16.mxu0 %v1182
    %1588 = vmatpush1.bf16.msra.mxu0 %v1181
    %1589 = vmatprep.subr.bf16.mxu0 %v1189
    %1590 = vmatpush1.bf16.msra.mxu0 %v1188
    %1591 = vmatprep.subr.bf16.mxu0 %v1196
    %1592 = vmatpush1.bf16.msra.mxu0 %v1195
    %1593 = vmatprep.subr.bf16.mxu0 %v1203
    %1594 = vmatpush1.bf16.msra.mxu0 %v1202
    %1595 = vmatprep.subr.bf16.mxu0 %v1210
    %1596 = vmatpush1.bf16.msra.mxu0 %v1209
    %1597 = vmatprep.subr.bf16.mxu0 %v1217
    %1598 = vmatpush1.bf16.msra.mxu0 %v1216
    %1599 = vmatprep.subr.bf16.mxu0 %v1224
    %1600 = vmatpush1.bf16.msra.mxu0 %v1223
    %1601 = vmatprep.subr.bf16.mxu0 %v1231
    %1602 = vmatpush1.bf16.msra.mxu0 %v1230
    %1603 = vmatprep.subr.bf16.mxu0 %v1238
    %1604 = vmatpush1.bf16.msra.mxu0 %v1237
    %1605 = vmatprep.subr.bf16.mxu0 %v1245
    %1606 = vmatpush1.bf16.msra.mxu0 %v1244
    %1607 = vmatprep.subr.bf16.mxu0 %v1252
    %1608 = vmatpush1.bf16.msra.mxu0 %v1251
    %1609 = vmatprep.subr.bf16.mxu0 %v1259
    %1610 = vmatpush1.bf16.msra.mxu0 %v1258
    %1611 = vmatprep.subr.bf16.mxu0 %v1266
    %1612 = vmatpush1.bf16.msra.mxu0 %v1265
    %1613 = vmatprep.subr.bf16.mxu0 %v1273
    %1614 = vmatpush1.bf16.msra.mxu0 %v1272
    %1615 = vmatprep.mubr.bf16.mxu0 %v406
    %1616 = vmatmul.mubr.bf16.gmra.mrb[0].mxu0 %v405
    %v1617 = vpop.f32.mrb[0].mxu0
    %v1618 = vadd.f32 %v613, %v1617
    %v1619 = vpop.f32.mrb[0].mxu0
    %v1620 = vadd.f32 %v617, %v1619
    %v1621 = vpop.f32.mrb[0].mxu0
    %v1622 = vpop.f32.mrb[0].mxu0
    %1623 = vdwg.mxu0
    %1624 = vmatprep.subr.bf16.mxu0 %v1280
    %1625 = vmatpush1.bf16.msra.mxu0 %v1279
    %1626 = vmatprep.subr.bf16.mxu0 %v1287
    %1627 = vmatpush1.bf16.msra.mxu0 %v1286
    %1628 = vmatprep.subr.bf16.mxu0 %v1294
    %1629 = vmatpush1.bf16.msra.mxu0 %v1293
    %1630 = vmatprep.subr.bf16.mxu0 %v1301
    %1631 = vmatpush1.bf16.msra.mxu0 %v1300
    %1632 = vmatprep.subr.bf16.mxu0 %v1308
    %1633 = vmatpush1.bf16.msra.mxu0 %v1307
    %1634 = vmatprep.subr.bf16.mxu0 %v1315
    %1635 = vmatpush1.bf16.msra.mxu0 %v1314
    %1636 = vmatprep.subr.bf16.mxu0 %v1322
    %1637 = vmatpush1.bf16.msra.mxu0 %v1321
    %1638 = vmatprep.subr.bf16.mxu0 %v1329
    %1639 = vmatpush1.bf16.msra.mxu0 %v1328
    %1640 = vmatprep.subr.bf16.mxu0 0
    %1641 = vmatpush1.bf16.msra.mxu0 0
    %1642 = vmatprep.subr.bf16.mxu0 0
    %1643 = vmatpush1.bf16.msra.mxu0 0
    %1644 = vmatprep.subr.bf16.mxu0 0
    %1645 = vmatpush1.bf16.msra.mxu0 0
    %1646 = vmatprep.subr.bf16.mxu0 0
    %1647 = vmatpush1.bf16.msra.mxu0 0
    %1648 = vmatprep.subr.bf16.mxu0 0
    %1649 = vmatpush1.bf16.msra.mxu0 0
    %1650 = vmatprep.subr.bf16.mxu0 0
    %1651 = vmatpush1.bf16.msra.mxu0 0
    %1652 = vmatprep.subr.bf16.mxu0 0
    %1653 = vmatpush1.bf16.msra.mxu0 0
    %1654 = vmatprep.subr.bf16.mxu0 0
    %1655 = vmatpush1.bf16.msra.mxu0 0
    %1656 = vmatprep.mubr.bf16.mxu0 0
    %1657 = vmatmul.mubr.bf16.gmra.mrb[0].mxu0 %v407
    %v1658 = vpop.f32.mrb[0].mxu0
    %v1659 = vadd.f32 %v1618, %v1658
    %v1660 = vpop.f32.mrb[0].mxu0
    %v1661 = vadd.f32 %v1620, %v1660
    %v1662 = vpop.f32.mrb[0].mxu0
    %v1663 = vpop.f32.mrb[0].mxu0
    %1664 = vdwg.mxu0
    %1665 = vmatprep.subr.bf16.mxu0 %v1170
    %1666 = vmatpush1.bf16.msra.mxu0 %v1169
    %1667 = vmatprep.subr.bf16.mxu0 %v1177
    %1668 = vmatpush1.bf16.msra.mxu0 %v1176
    %1669 = vmatprep.subr.bf16.mxu0 %v1184
    %1670 = vmatpush1.bf16.msra.mxu0 %v1183
    %1671 = vmatprep.subr.bf16.mxu0 %v1191
    %1672 = vmatpush1.bf16.msra.mxu0 %v1190
    %1673 = vmatprep.subr.bf16.mxu0 %v1198
    %1674 = vmatpush1.bf16.msra.mxu0 %v1197
    %1675 = vmatprep.subr.bf16.mxu0 %v1205
    %1676 = vmatpush1.bf16.msra.mxu0 %v1204
    %1677 = vmatprep.subr.bf16.mxu0 %v1212
    %1678 = vmatpush1.bf16.msra.mxu0 %v1211
    %1679 = vmatprep.subr.bf16.mxu0 %v1219
    %1680 = vmatpush1.bf16.msra.mxu0 %v1218
    %1681 = vmatprep.subr.bf16.mxu0 %v1226
    %1682 = vmatpush1.bf16.msra.mxu0 %v1225
    %1683 = vmatprep.subr.bf16.mxu0 %v1233
    %1684 = vmatpush1.bf16.msra.mxu0 %v1232
    %1685 = vmatprep.subr.bf16.mxu0 %v1240
    %1686 = vmatpush1.bf16.msra.mxu0 %v1239
    %1687 = vmatprep.subr.bf16.mxu0 %v1247
    %1688 = vmatpush1.bf16.msra.mxu0 %v1246
    %1689 = vmatprep.subr.bf16.mxu0 %v1254
    %1690 = vmatpush1.bf16.msra.mxu0 %v1253
    %1691 = vmatprep.subr.bf16.mxu0 %v1261
    %1692 = vmatpush1.bf16.msra.mxu0 %v1260
    %1693 = vmatprep.subr.bf16.mxu0 %v1268
    %1694 = vmatpush1.bf16.msra.mxu0 %v1267
    %1695 = vmatprep.subr.bf16.mxu0 %v1275
    %1696 = vmatpush1.bf16.msra.mxu0 %v1274
    %1697 = vmatprep.mubr.bf16.mxu0 %v406
    %1698 = vmatmul.mubr.bf16.gmra.mrb[0].mxu0 %v405
    %v1699 = vpop.f32.mrb[0].mxu0
    %v1700 = vadd.f32 %v621, %v1699
    %v1701 = vpop.f32.mrb[0].mxu0
    %v1702 = vadd.f32 %v625, %v1701
    %v1703 = vpop.f32.mrb[0].mxu0
    %v1704 = vpop.f32.mrb[0].mxu0
    %1705 = vdwg.mxu0
    %1706 = vmatprep.subr.bf16.mxu0 %v1282
    %1707 = vmatpush1.bf16.msra.mxu0 %v1281
    %1708 = vmatprep.subr.bf16.mxu0 %v1289
    %1709 = vmatpush1.bf16.msra.mxu0 %v1288
    %1710 = vmatprep.subr.bf16.mxu0 %v1296
    %1711 = vmatpush1.bf16.msra.mxu0 %v1295
    %1712 = vmatprep.subr.bf16.mxu0 %v1303
    %1713 = vmatpush1.bf16.msra.mxu0 %v1302
    %1714 = vmatprep.subr.bf16.mxu0 %v1310
    %1715 = vmatpush1.bf16.msra.mxu0 %v1309
    %1716 = vmatprep.subr.bf16.mxu0 %v1317
    %1717 = vmatpush1.bf16.msra.mxu0 %v1316
    %1718 = vmatprep.subr.bf16.mxu0 %v1324
    %1719 = vmatpush1.bf16.msra.mxu0 %v1323
    %1720 = vmatprep.subr.bf16.mxu0 %v1331
    %1721 = vmatpush1.bf16.msra.mxu0 %v1330
    %1722 = vmatprep.subr.bf16.mxu0 0
    %1723 = vmatpush1.bf16.msra.mxu0 0
    %1724 = vmatprep.subr.bf16.mxu0 0
    %1725 = vmatpush1.bf16.msra.mxu0 0
    %1726 = vmatprep.subr.bf16.mxu0 0
    %1727 = vmatpush1.bf16.msra.mxu0 0
    %1728 = vmatprep.subr.bf16.mxu0 0
    %1729 = vmatpush1.bf16.msra.mxu0 0
    %1730 = vmatprep.subr.bf16.mxu0 0
    %1731 = vmatpush1.bf16.msra.mxu0 0
    %1732 = vmatprep.subr.bf16.mxu0 0
    %1733 = vmatpush1.bf16.msra.mxu0 0
    %1734 = vmatprep.subr.bf16.mxu0 0
    %1735 = vmatpush1.bf16.msra.mxu0 0
    %1736 = vmatprep.subr.bf16.mxu0 0
    %1737 = vmatpush1.bf16.msra.mxu0 0
    %1738 = vmatprep.mubr.bf16.mxu0 0
    %1739 = vmatmul.mubr.bf16.gmra.mrb[0].mxu0 %v407
    %v1740 = vpop.f32.mrb[0].mxu0
    %v1741 = vadd.f32 %v1700, %v1740
    %v1742 = vpop.f32.mrb[0].mxu0
    %v1743 = vadd.f32 %v1702, %v1742
    %v1744 = vpop.f32.mrb[0].mxu0
    %v1745 = vpop.f32.mrb[0].mxu0
    %1746 = vdwg.mxu0
    %1747 = vmatprep.subr.bf16.mxu0 0
    %1748 = vmatpush1.bf16.msra.mxu0 %v1171
    %1749 = vmatprep.subr.bf16.mxu0 0
    %1750 = vmatpush1.bf16.msra.mxu0 %v1178
    %1751 = vmatprep.subr.bf16.mxu0 0
    %1752 = vmatpush1.bf16.msra.mxu0 %v1185
    %1753 = vmatprep.subr.bf16.mxu0 0
    %1754 = vmatpush1.bf16.msra.mxu0 %v1192
    %1755 = vmatprep.subr.bf16.mxu0 0
    %1756 = vmatpush1.bf16.msra.mxu0 %v1199
    %1757 = vmatprep.subr.bf16.mxu0 0
    %1758 = vmatpush1.bf16.msra.mxu0 %v1206
    %1759 = vmatprep.subr.bf16.mxu0 0
    %1760 = vmatpush1.bf16.msra.mxu0 %v1213
    %1761 = vmatprep.subr.bf16.mxu0 0
    %1762 = vmatpush1.bf16.msra.mxu0 %v1220
    %1763 = vmatprep.subr.bf16.mxu0 0
    %1764 = vmatpush1.bf16.msra.mxu0 %v1227
    %1765 = vmatprep.subr.bf16.mxu0 0
    %1766 = vmatpush1.bf16.msra.mxu0 %v1234
    %1767 = vmatprep.subr.bf16.mxu0 0
    %1768 = vmatpush1.bf16.msra.mxu0 %v1241
    %1769 = vmatprep.subr.bf16.mxu0 0
    %1770 = vmatpush1.bf16.msra.mxu0 %v1248
    %1771 = vmatprep.subr.bf16.mxu0 0
    %1772 = vmatpush1.bf16.msra.mxu0 %v1255
    %1773 = vmatprep.subr.bf16.mxu0 0
    %1774 = vmatpush1.bf16.msra.mxu0 %v1262
    %1775 = vmatprep.subr.bf16.mxu0 0
    %1776 = vmatpush1.bf16.msra.mxu0 %v1269
    %1777 = vmatprep.subr.bf16.mxu0 0
    %1778 = vmatpush1.bf16.msra.mxu0 %v1276
    %1779 = vmatprep.mubr.bf16.mxu0 %v406
    %1780 = vmatmul.mubr.bf16.gmra.mrb[0].mxu0 %v405
    %v1781 = vpop.f32.mrb[0].mxu0
    %v1782 = vadd.f32 %v629, %v1781
    %v1783 = vpop.f32.mrb[0].mxu0
    %v1784 = vpop.f32.mrb[0].mxu0
    %v1785 = vpop.f32.mrb[0].mxu0
    %1786 = vdwg.mxu0
    %1787 = vmatprep.subr.bf16.mxu0 0
    %1788 = vmatpush1.bf16.msra.mxu0 %v1283
    %1789 = vmatprep.subr.bf16.mxu0 0
    %1790 = vmatpush1.bf16.msra.mxu0 %v1290
    %1791 = vmatprep.subr.bf16.mxu0 0
    %1792 = vmatpush1.bf16.msra.mxu0 %v1297
    %1793 = vmatprep.subr.bf16.mxu0 0
    %1794 = vmatpush1.bf16.msra.mxu0 %v1304
    %1795 = vmatprep.subr.bf16.mxu0 0
    %1796 = vmatpush1.bf16.msra.mxu0 %v1311
    %1797 = vmatprep.subr.bf16.mxu0 0
    %1798 = vmatpush1.bf16.msra.mxu0 %v1318
    %1799 = vmatprep.subr.bf16.mxu0 0
    %1800 = vmatpush1.bf16.msra.mxu0 %v1325
    %1801 = vmatprep.subr.bf16.mxu0 0
    %1802 = vmatpush1.bf16.msra.mxu0 %v1332
    %1803 = vmatprep.subr.bf16.mxu0 0
    %1804 = vmatpush1.bf16.msra.mxu0 0
    %1805 = vmatprep.subr.bf16.mxu0 0
    %1806 = vmatpush1.bf16.msra.mxu0 0
    %1807 = vmatprep.subr.bf16.mxu0 0
    %1808 = vmatpush1.bf16.msra.mxu0 0
    %1809 = vmatprep.subr.bf16.mxu0 0
    %1810 = vmatpush1.bf16.msra.mxu0 0
    %1811 = vmatprep.subr.bf16.mxu0 0
    %1812 = vmatpush1.bf16.msra.mxu0 0
    %1813 = vmatprep.subr.bf16.mxu0 0
    %1814 = vmatpush1.bf16.msra.mxu0 0
    %1815 = vmatprep.subr.bf16.mxu0 0
    %1816 = vmatpush1.bf16.msra.mxu0 0
    %1817 = vmatprep.subr.bf16.mxu0 0
    %1818 = vmatpush1.bf16.msra.mxu0 0
    %1819 = vmatprep.mubr.bf16.mxu0 0
    %1820 = vmatmul.mubr.bf16.gmra.mrb[0].mxu0 %v407
    %v1821 = vpop.f32.mrb[0].mxu0
    %v1822 = vadd.f32 %v1782, %v1821
    %v1823 = vpop.f32.mrb[0].mxu0
    %v1824 = vpop.f32.mrb[0].mxu0
    %v1825 = vpop.f32.mrb[0].mxu0
    %1826 = vdwg.mxu0
    %v1827 = vxor.u32 %v1577, 2147483648
    %v1828 = vxor.u32 %v1579, 2147483648
    %v1829 = vxor.u32 %v1659, 2147483648
    %v1830 = vxor.u32 %v1661, 2147483648
    %v1831 = vxor.u32 %v1741, 2147483648
    %v1832 = vxor.u32 %v1743, 2147483648
    %v1833 = vxor.u32 %v1822, 2147483648
    %v1834 = vmul.f32 %v1827, 1.442695
    %v1835 = vpow.pop %v1834
    %v1836 = vmul.f32 %v1828, 1.442695
    %v1837 = vpow.pop %v1836
    %v1838 = vmul.f32 %v1829, 1.442695
    %v1839 = vpow.pop %v1838
    %v1840 = vmul.f32 %v1830, 1.442695
    %v1841 = vpow.pop %v1840
    %v1842 = vmul.f32 %v1831, 1.442695
    %v1843 = vpow.pop %v1842
    %v1844 = vmul.f32 %v1832, 1.442695
    %v1845 = vpow.pop %v1844
    %v1846 = vmul.f32 %v1833, 1.442695
    %v1847 = vpow.pop %v1846
    %v1848 = vadd.f32 %v1835, 1.0
    %v1849 = vadd.f32 %v1837, 1.0
    %v1850 = vadd.f32 %v1839, 1.0
    %v1851 = vadd.f32 %v1841, 1.0
    %v1852 = vadd.f32 %v1843, 1.0
    %v1853 = vadd.f32 %v1845, 1.0
    %v1854 = vadd.f32 %v1847, 1.0
    %v1855 = vrcp.pop %v1848
    %v1856 = vmul.f32 1.0, %v1855
    %v1857 = vrcp.pop %v1849
    %v1858 = vmul.f32 1.0, %v1857
    %v1859 = vrcp.pop %v1850
    %v1860 = vmul.f32 1.0, %v1859
    %v1861 = vrcp.pop %v1851
    %v1862 = vmul.f32 1.0, %v1861
    %v1863 = vrcp.pop %v1852
    %v1864 = vmul.f32 1.0, %v1863
    %v1865 = vrcp.pop %v1853
    %v1866 = vmul.f32 1.0, %v1865
    %v1867 = vrcp.pop %v1854
    %v1868 = vmul.f32 1.0, %v1867
    %1869 = vst [vmem:[#allocation10] sm:$0xff] %v1856
    %1870 = vst [vmem:[#allocation10 + $0x8] sm:$0xff] %v1858
    %1871 = vst [vmem:[#allocation10 + $0x10] sm:$0xff] %v1860
    %1872 = vst [vmem:[#allocation10 + $0x18] sm:$0xff] %v1862
    %1873 = vst [vmem:[#allocation10 + $0x20] sm:$0xff] %v1864
    %1874 = vst [vmem:[#allocation10 + $0x28] sm:$0xff] %v1866
    %1875 = vst [vmem:[#allocation10 + $0x30] sm:$0xff] %v1868
    // Predicated region
    $region46: #{decoder_forward.1} parent=1 // pred_check
      _
    $region47: #{decoder_forward.1} parent=1 // pred_check_branch
      %1877 = sbr.rel (0) target = $region49
    $region48: #{decoder_forward.1} parent=1 // pred_region
      %s1879 = ssub.s32 896, 896
      %1880 = vsyncadd [#allocation4], %s1879
      %s1882 = sshll.u32 [#allocation10], 4
      %s1883 = int_to_ptr.vmem [resolvable:$true] %s1882
      %1885 = dma.vmem_to_hbm [thread:$0]  %s1883, 896, %s7, [#allocation4]
    $region49: #{decoder_forward.1} parent=1 // pred_fallthru
      _
    // Predicated region
    $region50: #{decoder_forward.1} parent=1 // pred_check
      _
    $region51: #{decoder_forward.1} parent=1 // pred_check_branch
      %1887 = sbr.rel (0) target = $region53
    $region52: #{decoder_forward.1} parent=1 // pred_region
      %1888 = dma.done [#allocation4], 896
    $region53: #{decoder_forward.1} parent=1 // pred_fallthru
      _
    %1889 = vsyncpa [#allocation3], 1
    %1890 = vsyncpa [#allocation6], 1
    %1891 = vsyncpa [#allocation9], 1
    %1892 = vsyncpa [#allocation4], 1

</llo_original>
